<compile_context>
chip_gen: v5e
topology: v5e:2x2
jax: 0.10.0
libtpu: 0.0.40
codegen_flags: <defaults>
</compile_context>

<pallas_src>
import functools

import jax
import jax.numpy as jnp
import numpy as np
from jax import lax
from jax.experimental import pallas as pl
from jax.experimental.pallas import tpu as pltpu

EXPANSION = 4
_VMEM_LIMIT = 48 * 1024 * 1024  # explicit scoped-VMEM budget (fits v5e/v6e/v7x)


# ---------------------------------------------------------------------------
# small helpers
# ---------------------------------------------------------------------------
def _round_up(v, m):
    return ((v + m - 1) // m) * m


def _largest_divisor(n, cap):
    cap = min(cap, n)
    for t in range(cap, 0, -1):
        if n % t == 0:
            return t
    return n


def _pick_row_tile(m, target=256):
    if m <= target:
        return m
    for t in range(target, 0, -1):
        if m % t == 0 and t % 8 == 0:
            return t
    return m


# ---------------------------------------------------------------------------
# Kernel A: fused conv1 (1x1) + conv2 (3x3, pad=1, stride-on-H)
# ---------------------------------------------------------------------------
def _conv1_conv2_kernel(xp_ref, w1_ref, b1_ref, w2_ref, b2_ref, o_ref,
                        h1s_ref, acc_ref, *, stride, width, hp):
    # xp_ref : (1, Hp, Wp, Cin)  spatially padded input image (stays resident
    #                            across the row-block grid axis)
    # w1_ref : (Cin, P)          b1_ref: (1, P)
    # w2_ref : (3, 3P, P)        b2_ref: (1, P)   (w2_ref[kh] = concat_kw w2[kh,kw])
    # o_ref  : (1, TH, W, P)     conv2 output rows (stride applied on H only)
    # h1s_ref: (TH_in, Wp, 3P)   scratch: relu(conv1) band + its two kw-shifts
    # acc_ref: (TH*Wp, P)        f32 accumulator scratch
    r = pl.program_id(1)
    th = o_ref.shape[1]
    p = o_ref.shape[3]
    th_in, wp, _ = h1s_ref.shape
    cin = xp_ref.shape[3]

    row0 = r * (th * stride)  # first padded-input row needed by this block

    # ---- conv1 (1x1) on the row band, computed on the MXU -------------------
    xband = xp_ref[0, pl.ds(row0, th_in), :, :]              # (TH_in, Wp, Cin)
    h1 = jnp.dot(xband.reshape(th_in * wp, cin), w1_ref[...],
                 preferred_element_type=jnp.float32)
    h1 = jnp.maximum(h1 + b1_ref[...], 0.0).reshape(th_in, wp, p)

    # Zero conv2's padding positions: padded x is zero there, but
    # relu(0 @ w1 + b1) is not, so mask rows/cols that belong to the halo.
    row_id = row0 + lax.broadcasted_iota(jnp.int32, (th_in, wp, p), 0)
    col_id = lax.broadcasted_iota(jnp.int32, (th_in, wp, p), 1)
    valid = (row_id > 0) & (row_id < hp - 1) & (col_id > 0) & (col_id <= width)
    h1 = jnp.where(valid, h1, 0.0)

    # Pre-shift the band by the 3 kw offsets once and concatenate along the
    # channel (lane) axis -> each kh becomes ONE matmul with a 3P contraction
    # instead of 9 small sublane-sliced matmuls.
    s1 = jnp.concatenate(
        [h1[:, 1:, :], jnp.zeros((th_in, 1, p), jnp.float32)], axis=1)
    s2 = jnp.concatenate(
        [h1[:, 2:, :], jnp.zeros((th_in, 2, p), jnp.float32)], axis=1)
    h1s_ref[...] = jnp.concatenate([h1, s1, s2], axis=-1)

    # ---- conv2 (3x3); H-stride handled here via strided ref reads -----------
    for kh in range(3):
        if stride == 1:
            band = h1s_ref[pl.ds(kh, th), :, :]
        else:
            band = h1s_ref[pl.ds(kh, th, stride), :, :]
        contrib = jnp.dot(band.reshape(th * wp, 3 * p), w2_ref[kh],
                          preferred_element_type=jnp.float32)
        if kh == 0:
            acc_ref[...] = contrib
        else:
            acc_ref[...] += contrib

    res = jnp.maximum(acc_ref[...] + b2_ref[...], 0.0)
    res = res.reshape(th, wp, p)[:, :width, :]
    o_ref[0] = res.astype(o_ref.dtype)


def _fused_conv1_conv2(x, w1, b1, w2, b2, *, stride):
    n, h, w, cin = x.shape
    p = w1.shape[1]
    hp = h + 2
    wp = _round_up(w + 2, 8)          # keep the padded width sublane-aligned
    ho = (h - 1) // stride + 1
    th = _largest_divisor(ho, 8)      # output-row block size
    th_in = (th - 1) * stride + 3     # input rows (incl. halo) per block

    xp = jnp.pad(x, ((0, 0), (1, 1), (1, wp - w - 1), (0, 0)))
    w2s = w2.reshape(3, 3 * p, p)     # stack kw into the contraction dim

    kernel = functools.partial(_conv1_conv2_kernel,
                               stride=stride, width=w, hp=hp)
    h2 = pl.pallas_call(
        kernel,
        out_shape=jax.ShapeDtypeStruct((n, ho, w, p), x.dtype),
        grid=(n, ho // th),
        in_specs=[
            pl.BlockSpec((1, hp, wp, cin), lambda i, r: (i, 0, 0, 0)),
            pl.BlockSpec((cin, p), lambda i, r: (0, 0)),
            pl.BlockSpec((1, p), lambda i, r: (0, 0)),
            pl.BlockSpec((3, 3 * p, p), lambda i, r: (0, 0, 0)),
            pl.BlockSpec((1, p), lambda i, r: (0, 0)),
        ],
        out_specs=pl.BlockSpec((1, th, w, p), lambda i, r: (i, r, 0, 0)),
        scratch_shapes=[
            pltpu.VMEM((th_in, wp, 3 * p), jnp.float32),
            pltpu.VMEM((th * wp, p), jnp.float32),
        ],
        compiler_params=pltpu.CompilerParams(
            dimension_semantics=("parallel", "parallel"),
            vmem_limit_bytes=_VMEM_LIMIT),
    )(xp, w1, b1, w2s, b2)

    if stride != 1:
        # TODO(synk): fold the W-direction subsample into the kernel store too
        # (H-direction striding is already done in-kernel).
        h2 = h2[:, :, ::stride, :]
    return h2


# ---------------------------------------------------------------------------
# Kernel B: conv3 (1x1) + shortcut + residual add + relu (row-tiled matmuls)
# ---------------------------------------------------------------------------
def _conv3_proj_add_relu_kernel(h2_ref, w3_ref, b3_ref, xs_ref, ws_ref,
                                bs_ref, o_ref):
    acc = jnp.dot(h2_ref[...], w3_ref[...], preferred_element_type=jnp.float32)
    acc = acc + b3_ref[...]
    acc = acc + jnp.dot(xs_ref[...], ws_ref[...],
                        preferred_element_type=jnp.float32)
    acc = acc + bs_ref[...]
    o_ref[...] = jnp.maximum(acc, 0.0).astype(o_ref.dtype)


def _conv3_identity_add_relu_kernel(h2_ref, w3_ref, b3_ref, sc_ref, o_ref):
    acc = jnp.dot(h2_ref[...], w3_ref[...], preferred_element_type=jnp.float32)
    acc = acc + b3_ref[...] + sc_ref[...].astype(jnp.float32)
    o_ref[...] = jnp.maximum(acc, 0.0).astype(o_ref.dtype)


def _conv3_shortcut(h2, x, params, *, stride):
    n, ho, wo, p = h2.shape
    cin = x.shape[-1]
    c4 = params["w3"].shape[1]
    m = n * ho * wo
    tm = _pick_row_tile(m, 256)
    h2f = h2.reshape(m, p)
    cp = pltpu.CompilerParams(dimension_semantics=("parallel",),
                              vmem_limit_bytes=_VMEM_LIMIT)

    use_proj = (stride != 1) or (cin != c4)
    if use_proj:
        xs = x[:, ::stride, ::stride, :].reshape(m, cin)
        return pl.pallas_call(
            _conv3_proj_add_relu_kernel,
            out_shape=jax.ShapeDtypeStruct((m, c4), h2.dtype),
            grid=(m // tm,),
            in_specs=[
                pl.BlockSpec((tm, p), lambda i: (i, 0)),
                pl.BlockSpec((p, c4), lambda i: (0, 0)),
                pl.BlockSpec((1, c4), lambda i: (0, 0)),
                pl.BlockSpec((tm, cin), lambda i: (i, 0)),
                pl.BlockSpec((cin, c4), lambda i: (0, 0)),
                pl.BlockSpec((1, c4), lambda i: (0, 0)),
            ],
            out_specs=pl.BlockSpec((tm, c4), lambda i: (i, 0)),
            compiler_params=cp,
        )(h2f, params["w3"], params["b3"], xs, params["ws"], params["bs"])

    sc = x.reshape(m, cin)
    return pl.pallas_call(
        _conv3_identity_add_relu_kernel,
        out_shape=jax.ShapeDtypeStruct((m, c4), h2.dtype),
        grid=(m // tm,),
        in_specs=[
            pl.BlockSpec((tm, p), lambda i: (i, 0)),
            pl.BlockSpec((p, c4), lambda i: (0, 0)),
            pl.BlockSpec((1, c4), lambda i: (0, 0)),
            pl.BlockSpec((tm, cin), lambda i: (i, 0)),
        ],
        out_specs=pl.BlockSpec((tm, c4), lambda i: (i, 0)),
        compiler_params=cp,
    )(h2f, params["w3"], params["b3"], sc)


# ---------------------------------------------------------------------------
# Bottleneck forward (Pallas)
# ---------------------------------------------------------------------------
def bottleneck_forward(x_nchw, params, *, stride=1):
    """Forward pass equivalent to the PyTorch Bottleneck module (f32)."""
    # TODO(synk): when stacking blocks, keep NHWC between blocks and transpose
    # only at the network boundary.
    x = jnp.transpose(x_nchw, (0, 2, 3, 1))  # -> NHWC
    h2 = _fused_conv1_conv2(x, params["w1"], params["b1"], params["w2"],
                            params["b2"], stride=stride)
    out = _conv3_shortcut(h2, x, params, stride=stride)
    n, ho, wo, _ = h2.shape
    c4 = params["w3"].shape[1]
    out = out.reshape(n, ho, wo, c4)
    return jnp.transpose(out, (0, 3, 1, 2))  # back to NCHW

# TODO(synk): optional bf16 MXU path (2x on v6e/v7x) skipped to keep exact f32
# parity with the PyTorch module.


# ---------------------------------------------------------------------------
# Pure-JAX reference (for correctness check)
# ---------------------------------------------------------------------------
def bottleneck_ref(x_nchw, params, *, stride=1):
    dn = ("NHWC", "HWIO", "NHWC")
    x = jnp.transpose(x_nchw, (0, 2, 3, 1))
    cin = x.shape[-1]
    cexp = params["w3"].shape[1]

    def conv(v, w, s, pad):
        return lax.conv_general_dilated(v, w, (s, s), pad,
                                        dimension_numbers=dn)

    h1 = jax.nn.relu(conv(x, params["w1"][None, None], 1, "VALID") + params["b1"])
    h2 = jax.nn.relu(conv(h1, params["w2"], stride, [(1, 1), (1, 1)]) + params["b2"])
    h3 = conv(h2, params["w3"][None, None], 1, "VALID") + params["b3"]
    if stride != 1 or cin != cexp:
        sc = conv(x, params["ws"][None, None], stride, "VALID") + params["bs"]
    else:
        sc = x
    out = jax.nn.relu(h3 + sc)
    return jnp.transpose(out, (0, 3, 1, 2))


# ---------------------------------------------------------------------------
# Deterministic parameter init (shapes per Bottleneck.__init__)
# ---------------------------------------------------------------------------
def init_params(key, in_planes, planes, stride):
    cexp = EXPANSION * planes
    ks = jax.random.split(key, 8)
    scale = 0.1
    params = {
        # 1x1 conv weights stored as (Cin, Cout); 3x3 as (3, 3, Cin, Cout)
        "w1": scale * jax.random.normal(ks[0], (in_planes, planes), jnp.float32),
        "b1": scale * jax.random.normal(ks[1], (1, planes), jnp.float32),
        "w2": scale * jax.random.normal(ks[2], (3, 3, planes, planes), jnp.float32),
        "b2": scale * jax.random.normal(ks[3], (1, planes), jnp.float32),
        "w3": scale * jax.random.normal(ks[4], (planes, cexp), jnp.float32),
        "b3": scale * jax.random.normal(ks[5], (1, cexp), jnp.float32),
    }
    if stride != 1 or in_planes != cexp:
        params["ws"] = scale * jax.random.normal(ks[6], (in_planes, cexp), jnp.float32)
        params["bs"] = scale * jax.random.normal(ks[7], (1, cexp), jnp.float32)
    return params


# ---------------------------------------------------------------------------
if __name__ == "__main__":
    key = jax.random.PRNGKey(0)

    def run_case(k, n, in_planes, planes, hw, stride):
        kx, kp = jax.random.split(k)
        x = jax.random.normal(kx, (n, in_planes, hw, hw), jnp.float32)
        params = init_params(kp, in_planes, planes, stride)
        out = jax.block_until_ready(bottleneck_forward(x, params, stride=stride))
        ref = jax.block_until_ready(bottleneck_ref(x, params, stride=stride))
        ho = (hw - 1) // stride + 1
        assert out.shape == (n, EXPANSION * planes, ho, ho), out.shape
        np.testing.assert_allclose(np.asarray(out), np.asarray(ref),
                                   rtol=1e-4, atol=1e-5)

    k1, k2, k3 = jax.random.split(key, 3)
    run_case(k1, 2, 4, 4, 16, 1)    # projection shortcut (channel mismatch)
    run_case(k2, 2, 8, 4, 16, 2)    # stride-2 downsampling block
    run_case(k3, 2, 16, 4, 16, 1)   # identity shortcut

    print("KERNEL_OK")
</pallas_src>

<mosaic_0001>
module attributes {stable_mosaic.version = 11 : i64} {
  func.func @_conv1_conv2_kernel(%arg0: i32, %arg1: i32, %arg2: memref<1x18x24x4xf32, #tpu.memory_space<vmem>>, %arg3: memref<4x4xf32, #tpu.memory_space<vmem>>, %arg4: memref<1x4xf32, #tpu.memory_space<vmem>>, %arg5: memref<3x12x4xf32, #tpu.memory_space<vmem>>, %arg6: memref<1x4xf32, #tpu.memory_space<vmem>>, %arg7: memref<1x8x16x4xf32, #tpu.memory_space<vmem>>, %arg8: memref<10x24x12xf32, #tpu.memory_space<vmem>>, %arg9: memref<192x4xf32, #tpu.memory_space<vmem>>) attributes {dimension_semantics = [#tpu.dimension_semantics<parallel>, #tpu.dimension_semantics<parallel>], iteration_bounds = array<i64: 2, 2>, scalar_prefetch = 0 : i64, scratch_operands = 2 : i64, tpu.core_type = #tpu.core_type<tc>, window_params = [{transform_indices = @transform_0, window_bounds = array<i64: 1, 18, 24, 4>}, {pipeline_mode = #tpu.pipeline_mode<synchronous>, transform_indices = @transform_1, window_bounds = array<i64: 4, 4>}, {pipeline_mode = #tpu.pipeline_mode<synchronous>, transform_indices = @transform_2, window_bounds = array<i64: 1, 4>}, {pipeline_mode = #tpu.pipeline_mode<synchronous>, transform_indices = @transform_3, window_bounds = array<i64: 3, 12, 4>}, {pipeline_mode = #tpu.pipeline_mode<synchronous>, transform_indices = @transform_4, window_bounds = array<i64: 1, 4>}, {transform_indices = @transform_5, window_bounds = array<i64: 1, 8, 16, 4>}]} {
    %c8_i32 = arith.constant 8 : i32
    %0 = arith.muli %arg1, %c8_i32 : i32
    %c0 = arith.constant 0 : index
    %1 = arith.index_cast %0 : i32 to index
    %c0_0 = arith.constant 0 : index
    %c0_1 = arith.constant 0 : index
    %2 = vector.load %arg2[%c0, %1, %c0_0, %c0_1] : memref<1x18x24x4xf32, #tpu.memory_space<vmem>>, vector<1x10x24x4xf32>
    %3 = vector.shape_cast %2 : vector<1x10x24x4xf32> to vector<10x24x4xf32>
    %4 = vector.shape_cast %3 : vector<10x24x4xf32> to vector<240x4xf32>
    %c0_2 = arith.constant 0 : index
    %c0_3 = arith.constant 0 : index
    %5 = vector.load %arg3[%c0_2, %c0_3] : memref<4x4xf32, #tpu.memory_space<vmem>>, vector<4x4xf32>
    %cst = arith.constant dense<0.000000e+00> : vector<240x4xf32>
    %6 = tpu.matmul %4, %5, %cst {dimension_numbers = #tpu.dot_dimension_numbers<[1], [0], [0], [1], [0, 0, 1, 1], [], []>} : vector<240x4xf32>, vector<4x4xf32>, vector<240x4xf32> -> vector<240x4xf32>
    %c0_4 = arith.constant 0 : index
    %c0_5 = arith.constant 0 : index
    %7 = vector.load %arg4[%c0_4, %c0_5] : memref<1x4xf32, #tpu.memory_space<vmem>>, vector<1x4xf32>
    %8 = vector.broadcast %7 : vector<1x4xf32> to vector<240x4xf32>
    %9 = arith.addf %6, %8 : vector<240x4xf32>
    %cst_6 = arith.constant 0.000000e+00 : f32
    %10 = vector.broadcast %cst_6 : f32 to vector<240x4xf32>
    %11 = arith.maximumf %9, %10 : vector<240x4xf32>
    %12 = vector.shape_cast %11 : vector<240x4xf32> to vector<10x24x4xf32>
    %13 = tpu.iota {dimensions = array<i32: 0>} : vector<10x24x4xi32>
    %14 = vector.broadcast %0 : i32 to vector<10x24x4xi32>
    %15 = arith.addi %14, %13 : vector<10x24x4xi32>
    %16 = tpu.iota {dimensions = array<i32: 1>} : vector<10x24x4xi32>
    %c0_i32 = arith.constant 0 : i32
    %17 = vector.broadcast %c0_i32 : i32 to vector<10x24x4xi32>
    %18 = arith.cmpi sgt, %15, %17 : vector<10x24x4xi32>
    %c17_i32 = arith.constant 17 : i32
    %19 = vector.broadcast %c17_i32 : i32 to vector<10x24x4xi32>
    %20 = arith.cmpi slt, %15, %19 : vector<10x24x4xi32>
    %21 = arith.andi %18, %20 : vector<10x24x4xi1>
    %c0_i32_7 = arith.constant 0 : i32
    %22 = vector.broadcast %c0_i32_7 : i32 to vector<10x24x4xi32>
    %23 = arith.cmpi sgt, %16, %22 : vector<10x24x4xi32>
    %24 = arith.andi %21, %23 : vector<10x24x4xi1>
    %c16_i32 = arith.constant 16 : i32
    %25 = vector.broadcast %c16_i32 : i32 to vector<10x24x4xi32>
    %26 = arith.cmpi sle, %16, %25 : vector<10x24x4xi32>
    %27 = arith.andi %24, %26 : vector<10x24x4xi1>
    %cst_8 = arith.constant 0.000000e+00 : f32
    %28 = vector.broadcast %cst_8 : f32 to vector<10x24x4xf32>
    %29 = arith.select %27, %12, %28 : vector<10x24x4xi1>, vector<10x24x4xf32>
    %30 = vector.extract_strided_slice %29 {offsets = [0, 1, 0], sizes = [10, 23, 4], strides = [1, 1, 1]} : vector<10x24x4xf32> to vector<10x23x4xf32>
    %cst_9 = arith.constant 0.000000e+00 : f32
    %31 = vector.broadcast %cst_9 : f32 to vector<10x1x4xf32>
    %32 = tpu.concatenate %30, %31 in 1 : vector<10x23x4xf32>, vector<10x1x4xf32> -> vector<10x24x4xf32>
    %33 = vector.extract_strided_slice %29 {offsets = [0, 2, 0], sizes = [10, 22, 4], strides = [1, 1, 1]} : vector<10x24x4xf32> to vector<10x22x4xf32>
    %cst_10 = arith.constant 0.000000e+00 : f32
    %34 = vector.broadcast %cst_10 : f32 to vector<10x2x4xf32>
    %35 = tpu.concatenate %33, %34 in 1 : vector<10x22x4xf32>, vector<10x2x4xf32> -> vector<10x24x4xf32>
    %36 = tpu.concatenate %29, %32, %35 in 2 : vector<10x24x4xf32>, vector<10x24x4xf32>, vector<10x24x4xf32> -> vector<10x24x12xf32>
    %c0_11 = arith.constant 0 : index
    %c0_12 = arith.constant 0 : index
    %c0_13 = arith.constant 0 : index
    %37 = vector.load %arg8[%c0_11, %c0_12, %c0_13] : memref<10x24x12xf32, #tpu.memory_space<vmem>>, vector<10x24x12xf32>
    tpu.vector_store %arg8[%c0_11, %c0_12, %c0_13], %36 {strides = array<i32>} : memref<10x24x12xf32, #tpu.memory_space<vmem>>, vector<10x24x12xf32>,
    %c0_14 = arith.constant 0 : index
    %c0_15 = arith.constant 0 : index
    %c0_16 = arith.constant 0 : index
    %38 = vector.load %arg8[%c0_14, %c0_15, %c0_16] : memref<10x24x12xf32, #tpu.memory_space<vmem>>, vector<8x24x12xf32>
    %39 = vector.shape_cast %38 : vector<8x24x12xf32> to vector<192x12xf32>
    %c0_17 = arith.constant 0 : index
    %c0_18 = arith.constant 0 : index
    %c0_19 = arith.constant 0 : index
    %40 = vector.load %arg5[%c0_17, %c0_18, %c0_19] : memref<3x12x4xf32, #tpu.memory_space<vmem>>, vector<1x12x4xf32>
    %41 = vector.shape_cast %40 : vector<1x12x4xf32> to vector<12x4xf32>
    %cst_20 = arith.constant dense<0.000000e+00> : vector<192x4xf32>
    %42 = tpu.matmul %39, %41, %cst_20 {dimension_numbers = #tpu.dot_dimension_numbers<[1], [0], [0], [1], [0, 0, 1, 1], [], []>} : vector<192x12xf32>, vector<12x4xf32>, vector<192x4xf32> -> vector<192x4xf32>
    %c0_21 = arith.constant 0 : index
    %c0_22 = arith.constant 0 : index
    %43 = vector.load %arg9[%c0_21, %c0_22] : memref<192x4xf32, #tpu.memory_space<vmem>>, vector<192x4xf32>
    tpu.vector_store %arg9[%c0_21, %c0_22], %42 {strides = array<i32>} : memref<192x4xf32, #tpu.memory_space<vmem>>, vector<192x4xf32>,
    %c1 = arith.constant 1 : index
    %c0_23 = arith.constant 0 : index
    %c0_24 = arith.constant 0 : index
    %44 = vector.load %arg8[%c1, %c0_23, %c0_24] : memref<10x24x12xf32, #tpu.memory_space<vmem>>, vector<8x24x12xf32>
    %45 = vector.shape_cast %44 : vector<8x24x12xf32> to vector<192x12xf32>
    %c1_25 = arith.constant 1 : index
    %c0_26 = arith.constant 0 : index
    %c0_27 = arith.constant 0 : index
    %46 = vector.load %arg5[%c1_25, %c0_26, %c0_27] : memref<3x12x4xf32, #tpu.memory_space<vmem>>, vector<1x12x4xf32>
    %47 = vector.shape_cast %46 : vector<1x12x4xf32> to vector<12x4xf32>
    %cst_28 = arith.constant dense<0.000000e+00> : vector<192x4xf32>
    %48 = tpu.matmul %45, %47, %cst_28 {dimension_numbers = #tpu.dot_dimension_numbers<[1], [0], [0], [1], [0, 0, 1, 1], [], []>} : vector<192x12xf32>, vector<12x4xf32>, vector<192x4xf32> -> vector<192x4xf32>
    %c0_29 = arith.constant 0 : index
    %c0_30 = arith.constant 0 : index
    %49 = vector.load %arg9[%c0_29, %c0_30] : memref<192x4xf32, #tpu.memory_space<vmem>>, vector<192x4xf32>
    %50 = arith.addf %49, %48 : vector<192x4xf32>
    %c0_31 = arith.constant 0 : index
    %c0_32 = arith.constant 0 : index
    %51 = vector.load %arg9[%c0_31, %c0_32] : memref<192x4xf32, #tpu.memory_space<vmem>>, vector<192x4xf32>
    tpu.vector_store %arg9[%c0_31, %c0_32], %50 {strides = array<i32>} : memref<192x4xf32, #tpu.memory_space<vmem>>, vector<192x4xf32>,
    %c2 = arith.constant 2 : index
    %c0_33 = arith.constant 0 : index
    %c0_34 = arith.constant 0 : index
    %52 = vector.load %arg8[%c2, %c0_33, %c0_34] : memref<10x24x12xf32, #tpu.memory_space<vmem>>, vector<8x24x12xf32>
    %53 = vector.shape_cast %52 : vector<8x24x12xf32> to vector<192x12xf32>
    %c2_35 = arith.constant 2 : index
    %c0_36 = arith.constant 0 : index
    %c0_37 = arith.constant 0 : index
    %54 = vector.load %arg5[%c2_35, %c0_36, %c0_37] : memref<3x12x4xf32, #tpu.memory_space<vmem>>, vector<1x12x4xf32>
    %55 = vector.shape_cast %54 : vector<1x12x4xf32> to vector<12x4xf32>
    %cst_38 = arith.constant dense<0.000000e+00> : vector<192x4xf32>
    %56 = tpu.matmul %53, %55, %cst_38 {dimension_numbers = #tpu.dot_dimension_numbers<[1], [0], [0], [1], [0, 0, 1, 1], [], []>} : vector<192x12xf32>, vector<12x4xf32>, vector<192x4xf32> -> vector<192x4xf32>
    %c0_39 = arith.constant 0 : index
    %c0_40 = arith.constant 0 : index
    %57 = vector.load %arg9[%c0_39, %c0_40] : memref<192x4xf32, #tpu.memory_space<vmem>>, vector<192x4xf32>
    %58 = arith.addf %57, %56 : vector<192x4xf32>
    %c0_41 = arith.constant 0 : index
    %c0_42 = arith.constant 0 : index
    %59 = vector.load %arg9[%c0_41, %c0_42] : memref<192x4xf32, #tpu.memory_space<vmem>>, vector<192x4xf32>
    tpu.vector_store %arg9[%c0_41, %c0_42], %58 {strides = array<i32>} : memref<192x4xf32, #tpu.memory_space<vmem>>, vector<192x4xf32>,
    %c0_43 = arith.constant 0 : index
    %c0_44 = arith.constant 0 : index
    %60 = vector.load %arg9[%c0_43, %c0_44] : memref<192x4xf32, #tpu.memory_space<vmem>>, vector<192x4xf32>
    %c0_45 = arith.constant 0 : index
    %c0_46 = arith.constant 0 : index
    %61 = vector.load %arg6[%c0_45, %c0_46] : memref<1x4xf32, #tpu.memory_space<vmem>>, vector<1x4xf32>
    %62 = vector.broadcast %61 : vector<1x4xf32> to vector<192x4xf32>
    %63 = arith.addf %60, %62 : vector<192x4xf32>
    %cst_47 = arith.constant 0.000000e+00 : f32
    %64 = vector.broadcast %cst_47 : f32 to vector<192x4xf32>
    %65 = arith.maximumf %63, %64 : vector<192x4xf32>
    %66 = vector.shape_cast %65 : vector<192x4xf32> to vector<8x24x4xf32>
    %67 = vector.extract_strided_slice %66 {offsets = [0, 0, 0], sizes = [8, 16, 4], strides = [1, 1, 1]} : vector<8x24x4xf32> to vector<8x16x4xf32>
    %c0_48 = arith.constant 0 : index
    %c0_49 = arith.constant 0 : index
    %c0_50 = arith.constant 0 : index
    %c0_51 = arith.constant 0 : index
    %68 = vector.load %arg7[%c0_48, %c0_49, %c0_50, %c0_51] : memref<1x8x16x4xf32, #tpu.memory_space<vmem>>, vector<1x8x16x4xf32>
    %69 = vector.shape_cast %68 : vector<1x8x16x4xf32> to vector<8x16x4xf32>
    %70 = vector.shape_cast %67 : vector<8x16x4xf32> to vector<1x8x16x4xf32>
    tpu.vector_store %arg7[%c0_48, %c0_49, %c0_50, %c0_51], %70 {strides = array<i32>} : memref<1x8x16x4xf32, #tpu.memory_space<vmem>>, vector<1x8x16x4xf32>,
    return
  }
  func.func @transform_0(%arg0: i32, %arg1: i32) -> (i32, i32, i32, i32) {
    %c0_i32 = arith.constant 0 : i32
    %c0_i32_0 = arith.constant 0 : i32
    %c0_i32_1 = arith.constant 0 : i32
    %c0_i32_2 = arith.constant 0 : i32
    return %arg0, %c0_i32, %c0_i32_0, %c0_i32_1 : i32, i32, i32, i32
  }
  func.func @transform_1(%arg0: i32, %arg1: i32) -> (i32, i32) {
    %c0_i32 = arith.constant 0 : i32
    %c0_i32_0 = arith.constant 0 : i32
    %c0_i32_1 = arith.constant 0 : i32
    return %c0_i32, %c0_i32_0 : i32, i32
  }
  func.func @transform_2(%arg0: i32, %arg1: i32) -> (i32, i32) {
    %c0_i32 = arith.constant 0 : i32
    %c0_i32_0 = arith.constant 0 : i32
    %c0_i32_1 = arith.constant 0 : i32
    return %c0_i32, %c0_i32_0 : i32, i32
  }
  func.func @transform_3(%arg0: i32, %arg1: i32) -> (i32, i32, i32) {
    %c0_i32 = arith.constant 0 : i32
    %c0_i32_0 = arith.constant 0 : i32
    %c0_i32_1 = arith.constant 0 : i32
    %c0_i32_2 = arith.constant 0 : i32
    return %c0_i32, %c0_i32_0, %c0_i32_1 : i32, i32, i32
  }
  func.func @transform_4(%arg0: i32, %arg1: i32) -> (i32, i32) {
    %c0_i32 = arith.constant 0 : i32
    %c0_i32_0 = arith.constant 0 : i32
    %c0_i32_1 = arith.constant 0 : i32
    return %c0_i32, %c0_i32_0 : i32, i32
  }
  func.func @transform_5(%arg0: i32, %arg1: i32) -> (i32, i32, i32, i32) {
    %c0_i32 = arith.constant 0 : i32
    %c0_i32_0 = arith.constant 0 : i32
    %c0_i32_1 = arith.constant 0 : i32
    return %arg0, %arg1, %c0_i32, %c0_i32_0 : i32, i32, i32, i32
  }
}

</mosaic_0001>

<llo_original>
// kernel: tpu_custom_call.1
$region0: #{tpu_custom_call.1}
  #allocation0 [shape = 'u32[]', space=smem, size = 0x4, offset = 0x4, fixed_abs, tag = 'smem constant byte address 0x4 - core index']
  #allocation1 [shape = 'u32[72,128]{1,0:T(1,128)}', space=vmem, size = 0x9000, scoped, tag = 'internal scratch']
  #allocation2 [shape = 'f32[10,24,12]{2,1,0:T(8,128)}', space=vmem, size = 0x1e000, scoped, tag = 'scratch operand']
  #allocation3 [shape = 'f32[192,4]{1,0:T(8,128)}', space=vmem, size = 0x18000, scoped, tag = 'scratch operand']
  %s0 = inlined_call_operand.vmem [shape: f32[2,18,24,4], index: 0, kind: input, shape index: {}]
  %s1 = inlined_call_operand.vmem [shape: f32[4,4], index: 1, kind: input, shape index: {}]
  %s2 = inlined_call_operand.vmem [shape: f32[1,4], index: 2, kind: input, shape index: {}]
  %s3 = inlined_call_operand.vmem [shape: f32[3,12,4], index: 3, kind: input, shape index: {}]
  %s4 = inlined_call_operand.vmem [shape: f32[1,4], index: 4, kind: input, shape index: {}]
  %s5 = inlined_call_operand.vmem [shape: f32[2,16,16,4], index: 5, kind: output, shape index: {}]
  %s6 = sld [smem:[#allocation0]]
  $region53: #{tpu_custom_call.1} parent=0
    _
  %s8 = ssub.s32 1, %s6
  %s9 = scalar_select 0, %s8, %s6
  loop: start=0, step=1, limit=6
  $region2: #{tpu_custom_call.1} parent=0 // loop_pre_header
    _
  $region3: #{tpu_custom_call.1} parent=0 // loop_header
    %s11 = sphi 0, %s15
    %p12 = scmp.ge.s32.totalorder %s11, 6
    %s18 = sphi 0, %s30
    %s19 = sphi 0, %s26
    %s20 = sphi 0, %s18
    %s21 = sphi 0, %s19
    %s22 = sphi 0, %s20
    %s23 = sphi 0, %s21
    %s33 = sphi 0, %s35
    %s36 = sphi 0, %s33
    %s37 = sphi 0, %s36
    %s53 = sphi 0, %s37
    %s57 = sphi 0, %s57
    %s59 = sphi 0, %s57
    %s60 = sphi 0, %s59
    %s74 = sphi 0, %s60
    %s78 = sphi 0, %s78
    %s80 = sphi 0, %s78
    %s81 = sphi 0, %s80
    %s95 = sphi 0, %s81
    %s99 = sphi 0, %s99
    %s101 = sphi 0, %s99
    %s102 = sphi 0, %s101
    %s116 = sphi 0, %s102
    %s120 = sphi 0, %s120
    %s122 = sphi 0, %s120
    %s123 = sphi 0, %s122
    %s137 = sphi 0, %s123
    %s145 = sphi 0, %s147
    %s148 = sphi 0, %s145
    %s149 = sphi 0, %s148
    %s165 = sphi 0, %s149
  $region4: #{tpu_custom_call.1} parent=0 // loop_header_branch
    %14 = sbr.rel (%p12) target = $region8
  $region5: #{tpu_custom_call.1} parent=0 // loop_body
    %s16 = ssub.s32 %s11, 1
    %s17 = ssub.s32 %s11, 2
    %s24 = sadd.s32 1, %s19
    %p25 = scmp.ge.s32.totalorder %s24, 2
    %s26 = scalar_select %p25, 0, %s24
    %s27 = sadd.s32 1, %s18
    %s28 = scalar_select %p25, %s27, %s18
    %p29 = scmp.ge.s32.totalorder %s28, 2
    %s30 = scalar_select %p29, 0, %s28
    %s31 = ssub.s32 %s18, %s30
    %p32 = scmp.eq.s32.totalorder %s31, 0
    %s34 = sadd.s32 %s33, 1
    %s35 = scalar_select %p32, %s33, %s34
    %p38 = pneg %p32
    %p39 = scmp.eq.s32.totalorder %s11, 3
    %p40 = por %p38, %p39
    %p41 = scmp.ne.s32.totalorder %s33, %s36
    %p42 = scmp.eq.s32.totalorder %s11, 0
    %p43 = por %p41, %p42
    %p44 = scmp.ne.s32.totalorder %s33, %s36
    %p45 = scmp.eq.s32.totalorder %s16, 3
    %p46 = por %p44, %p45
    %p47 = scmp.ne.s32.totalorder %s36, %s37
    %p48 = scmp.eq.s32.totalorder %s16, 0
    %p49 = por %p47, %p48
    %p50 = scmp.ne.s32.totalorder %s36, %s37
    %p51 = scmp.eq.s32.totalorder %s17, 3
    %p52 = por %p50, %p51
    %p54 = scmp.ne.s32.totalorder %s37, %s53
    %p55 = scmp.eq.s32.totalorder %s17, 0
    %p56 = por %p54, %p55
    %s58 = sadd.s32 %s57, 1
    %p61 = scmp.eq.s32.totalorder %s11, 3
    %p62 = scmp.ne.s32.totalorder %s57, %s59
    %p63 = scmp.eq.s32.totalorder %s11, 0
    %p64 = por %p62, %p63
    %p65 = scmp.ne.s32.totalorder %s57, %s59
    %p66 = scmp.eq.s32.totalorder %s16, 3
    %p67 = por %p65, %p66
    %p68 = scmp.ne.s32.totalorder %s59, %s60
    %p69 = scmp.eq.s32.totalorder %s16, 0
    %p70 = por %p68, %p69
    %p71 = scmp.ne.s32.totalorder %s59, %s60
    %p72 = scmp.eq.s32.totalorder %s17, 3
    %p73 = por %p71, %p72
    %p75 = scmp.ne.s32.totalorder %s60, %s74
    %p76 = scmp.eq.s32.totalorder %s17, 0
    %p77 = por %p75, %p76
    %s79 = sadd.s32 %s78, 1
    %p82 = scmp.eq.s32.totalorder %s11, 3
    %p83 = scmp.ne.s32.totalorder %s78, %s80
    %p84 = scmp.eq.s32.totalorder %s11, 0
    %p85 = por %p83, %p84
    %p86 = scmp.ne.s32.totalorder %s78, %s80
    %p87 = scmp.eq.s32.totalorder %s16, 3
    %p88 = por %p86, %p87
    %p89 = scmp.ne.s32.totalorder %s80, %s81
    %p90 = scmp.eq.s32.totalorder %s16, 0
    %p91 = por %p89, %p90
    %p92 = scmp.ne.s32.totalorder %s80, %s81
    %p93 = scmp.eq.s32.totalorder %s17, 3
    %p94 = por %p92, %p93
    %p96 = scmp.ne.s32.totalorder %s81, %s95
    %p97 = scmp.eq.s32.totalorder %s17, 0
    %p98 = por %p96, %p97
    %s100 = sadd.s32 %s99, 1
    %p103 = scmp.eq.s32.totalorder %s11, 3
    %p104 = scmp.ne.s32.totalorder %s99, %s101
    %p105 = scmp.eq.s32.totalorder %s11, 0
    %p106 = por %p104, %p105
    %p107 = scmp.ne.s32.totalorder %s99, %s101
    %p108 = scmp.eq.s32.totalorder %s16, 3
    %p109 = por %p107, %p108
    %p110 = scmp.ne.s32.totalorder %s101, %s102
    %p111 = scmp.eq.s32.totalorder %s16, 0
    %p112 = por %p110, %p111
    %p113 = scmp.ne.s32.totalorder %s101, %s102
    %p114 = scmp.eq.s32.totalorder %s17, 3
    %p115 = por %p113, %p114
    %p117 = scmp.ne.s32.totalorder %s102, %s116
    %p118 = scmp.eq.s32.totalorder %s17, 0
    %p119 = por %p117, %p118
    %s121 = sadd.s32 %s120, 1
    %p124 = scmp.eq.s32.totalorder %s11, 3
    %p125 = scmp.ne.s32.totalorder %s120, %s122
    %p126 = scmp.eq.s32.totalorder %s11, 0
    %p127 = por %p125, %p126
    %p128 = scmp.ne.s32.totalorder %s120, %s122
    %p129 = scmp.eq.s32.totalorder %s16, 3
    %p130 = por %p128, %p129
    %p131 = scmp.ne.s32.totalorder %s122, %s123
    %p132 = scmp.eq.s32.totalorder %s16, 0
    %p133 = por %p131, %p132
    %p134 = scmp.ne.s32.totalorder %s122, %s123
    %p135 = scmp.eq.s32.totalorder %s17, 3
    %p136 = por %p134, %p135
    %p138 = scmp.ne.s32.totalorder %s123, %s137
    %p139 = scmp.eq.s32.totalorder %s17, 0
    %p140 = por %p138, %p139
    %s141 = ssub.s32 %s18, %s30
    %s142 = ssub.s32 %s19, %s26
    %s143 = sor.u32 %s141, %s142
    %p144 = scmp.eq.s32.totalorder %s143, 0
    %s146 = sadd.s32 %s145, 1
    %s147 = scalar_select %p144, %s145, %s146
    %p150 = pneg %p144
    %p151 = scmp.eq.s32.totalorder %s11, 3
    %p152 = por %p150, %p151
    %p153 = scmp.ne.s32.totalorder %s145, %s148
    %p154 = scmp.eq.s32.totalorder %s11, 0
    %p155 = por %p153, %p154
    %p156 = scmp.ne.s32.totalorder %s145, %s148
    %p157 = scmp.eq.s32.totalorder %s16, 3
    %p158 = por %p156, %p157
    %p159 = scmp.ne.s32.totalorder %s148, %s149
    %p160 = scmp.eq.s32.totalorder %s16, 0
    %p161 = por %p159, %p160
    %p162 = scmp.ne.s32.totalorder %s148, %s149
    %p163 = scmp.eq.s32.totalorder %s17, 3
    %p164 = por %p162, %p163
    %p166 = scmp.ne.s32.totalorder %s149, %s165
    %p167 = scmp.eq.s32.totalorder %s17, 0
    %p168 = por %p166, %p167
    %p169 = scmp.le.s32.totalorder 1, %s11
    %p170 = scmp.lt.s32.totalorder %s11, 5
    %p171 = pnand %p169, %p170
    %p172 = pneg %p171
    // Predicated region
    $region9: #{tpu_custom_call.1} parent=5 // pred_check
      _
    $region10: #{tpu_custom_call.1} parent=5 // pred_check_branch
      %174 = sbr.rel (%p171) target = $region12
    $region11: #{tpu_custom_call.1} parent=5 // pred_region
      %s175 = ssub.s32 %s11, 1
      // Predicated region
      $region13: #{tpu_custom_call.1} parent=11 // pred_check
        %p176 = pneg %p70
      $region14: #{tpu_custom_call.1} parent=11 // pred_check_branch
        %178 = sbr.rel (%p176) target = $region16
      $region15: #{tpu_custom_call.1} parent=11 // pred_region
        _
      $region16: #{tpu_custom_call.1} parent=11 // pred_fallthru
        _
      // Predicated region
      $region17: #{tpu_custom_call.1} parent=11 // pred_check
        %p179 = pneg %p91
      $region18: #{tpu_custom_call.1} parent=11 // pred_check_branch
        %181 = sbr.rel (%p179) target = $region20
      $region19: #{tpu_custom_call.1} parent=11 // pred_region
        _
      $region20: #{tpu_custom_call.1} parent=11 // pred_fallthru
        _
      // Predicated region
      $region21: #{tpu_custom_call.1} parent=11 // pred_check
        %p182 = pneg %p112
      $region22: #{tpu_custom_call.1} parent=11 // pred_check_branch
        %184 = sbr.rel (%p182) target = $region24
      $region23: #{tpu_custom_call.1} parent=11 // pred_region
        _
      $region24: #{tpu_custom_call.1} parent=11 // pred_fallthru
        _
      // Predicated region
      $region25: #{tpu_custom_call.1} parent=11 // pred_check
        %p185 = pneg %p133
      $region26: #{tpu_custom_call.1} parent=11 // pred_check_branch
        %187 = sbr.rel (%p185) target = $region28
      $region27: #{tpu_custom_call.1} parent=11 // pred_region
        _
      $region28: #{tpu_custom_call.1} parent=11 // pred_fallthru
        _
    $region12: #{tpu_custom_call.1} parent=5 // pred_fallthru
      _
    %p188 = scmp.lt.s32.totalorder %s11, 4
    // Predicated region
    $region29: #{tpu_custom_call.1} parent=5 // pred_check
      %p189 = pneg %p188
    $region30: #{tpu_custom_call.1} parent=5 // pred_check_branch
      %191 = sbr.rel (%p189) target = $region32
    $region31: #{tpu_custom_call.1} parent=5 // pred_region
      // Predicated region
      $region33: #{tpu_custom_call.1} parent=31 // pred_check
        %p192 = pneg %p43
      $region34: #{tpu_custom_call.1} parent=31 // pred_check_branch
        %194 = sbr.rel (%p192) target = $region36
      $region35: #{tpu_custom_call.1} parent=31 // pred_region
        %p195 = scmp.lt.s32.totalorder %s18, 1
        %s196 = scalar_select %p195, %s18, 1
        %s197 = smul.addr %s196, 54
        %s198 = smul.addr %s197, 8
        %s199 = scalar_lea.vmem %s0, %s198
      $region36: #{tpu_custom_call.1} parent=31 // pred_fallthru
        _
    $region32: #{tpu_custom_call.1} parent=5 // pred_fallthru
      _
    %p200 = scmp.le.s32.totalorder 1, %s11
    %p201 = scmp.lt.s32.totalorder %s11, 5
    %p202 = pnand %p200, %p201
    %p203 = pneg %p202
    // Predicated region
    $region37: #{tpu_custom_call.1} parent=5 // pred_check
      _
    $region38: #{tpu_custom_call.1} parent=5 // pred_check_branch
      %205 = sbr.rel (%p202) target = $region40
    $region39: #{tpu_custom_call.1} parent=5 // pred_region
      %s206 = ssub.s32 %s11, 1
      %p207 = scmp.lt.s32.totalorder %s20, 1
      %s208 = scalar_select %p207, %s20, 1
      %s209 = smul.addr %s208, 54
      %s210 = smul.addr %s209, 8
      %s211 = scalar_lea.vmem %s0, %s210
      %p212 = pneg %p49
      %p213 = pneg %p46
      %p214 = pneg %p70
      %p215 = pneg %p67
      %p216 = pneg %p91
      %p217 = pneg %p88
      %p218 = pneg %p112
      %p219 = pneg %p109
      %p220 = pneg %p133
      %p221 = pneg %p130
      %p222 = pneg %p161
      %p223 = pneg %p158
      %s224 = smul.u32 8, %s21
      %p225 = scmp.lt.s32.totalorder %s20, 1
      %s226 = scalar_select %p225, %s20, 1
      %p227 = scmp.lt.s32.totalorder %s224, 15
      %s228 = scalar_select %p227, %s224, 15
      %s229 = smul.addr %s228, 2
      %s230 = smul.addr %s226, 32
      %s231 = sadd.s32 %s229, %s230
      %s232 = smul.addr %s231, 8
      %s233 = scalar_lea.vmem %s5, %s232
      %p234 = scmp.lt.s32.totalorder %s20, 1
      %s235 = scalar_select %p234, %s20, 1
      %s236 = smul.addr %s235, 54
      %s237 = smul.addr %s236, 8
      %s238 = scalar_lea.vmem %s0, %s237
      %s239 = smul.u32 8, %s21
      %p240 = scmp.lt.s32.totalorder %s20, 1
      %s241 = scalar_select %p240, %s20, 1
      %p242 = scmp.lt.s32.totalorder %s239, 15
      %s243 = scalar_select %p242, %s239, 15
      %s244 = smul.addr %s243, 2
      %s245 = smul.addr %s241, 32
      %s246 = sadd.s32 %s244, %s245
      %s247 = smul.addr %s246, 8
      %s248 = scalar_lea.vmem %s5, %s247
      %s249 = smul.u32 8, %s21
      %s250 = smul.u32 %s21, 8
      %s251 = smul.u32 %s250, 24
      %s252 = scalar_lea.vmem %s238, %s251
      %v253 = vld [vmem:[%s252] sm:$0xff]
      %v254 = vld [vmem:[%s252 + $0x8] sm:$0xff]
      %v255 = vld [vmem:[%s252 + $0x10] sm:$0xff]
      %v256 = vld [vmem:[%s252 + $0x18] sm:$0xff]
      %v257 = vld [vmem:[%s252 + $0x20] sm:$0xff]
      %v258 = vld [vmem:[%s252 + $0x28] sm:$0xff]
      %v259 = vld [vmem:[%s252 + $0x30] sm:$0xff]
      %v260 = vld [vmem:[%s252 + $0x38] sm:$0xff]
      %v261 = vld [vmem:[%s252 + $0x40] sm:$0xff]
      %v262 = vld [vmem:[%s252 + $0x48] sm:$0xff]
      %v263 = vld [vmem:[%s252 + $0x50] sm:$0xff]
      %v264 = vld [vmem:[%s252 + $0x58] sm:$0xff]
      %v265 = vld [vmem:[%s252 + $0x60] sm:$0xff]
      %v266 = vld [vmem:[%s252 + $0x68] sm:$0xff]
      %v267 = vld [vmem:[%s252 + $0x70] sm:$0xff]
      %v268 = vld [vmem:[%s252 + $0x78] sm:$0xff]
      %v269 = vld [vmem:[%s252 + $0x80] sm:$0xff]
      %v270 = vld [vmem:[%s252 + $0x88] sm:$0xff]
      %v271 = vld [vmem:[%s252 + $0x90] sm:$0xff]
      %v272 = vld [vmem:[%s252 + $0x98] sm:$0xff]
      %v273 = vld [vmem:[%s252 + $0xa0] sm:$0xff]
      %v274 = vld [vmem:[%s252 + $0xa8] sm:$0xff]
      %v275 = vld [vmem:[%s252 + $0xb0] sm:$0xff]
      %v276 = vld [vmem:[%s252 + $0xb8] sm:$0xff]
      %v277 = vld [vmem:[%s252 + $0xc0] sm:$0xff]
      %v278 = vld [vmem:[%s252 + $0xc8] sm:$0xff]
      %v279 = vld [vmem:[%s252 + $0xd0] sm:$0xff]
      %v280 = vld [vmem:[%s252 + $0xd8] sm:$0xff]
      %v281 = vld [vmem:[%s252 + $0xe0] sm:$0xff]
      %v282 = vld [vmem:[%s252 + $0xe8] sm:$0xff]
      %v283 = vld [vmem:[%s1] sm:$0xf]
      %v284 = vld [vmem:[%s2] sm:$0x1]
      %v286 = vperm.slane %v284, 0
      %vm288 = vcmask 31744
      %v290 = vsel %vm288, %v253, 0
      %v293 = vsel %vm288, %v254, 0
      %v296 = vsel %vm288, %v255, 0
      %v299 = vsel %vm288, %v256, 0
      %v302 = vsel %vm288, %v257, 0
      %v305 = vsel %vm288, %v258, 0
      %v308 = vsel %vm288, %v259, 0
      %v311 = vsel %vm288, %v260, 0
      %v314 = vsel %vm288, %v261, 0
      %v317 = vsel %vm288, %v262, 0
      %v320 = vsel %vm288, %v263, 0
      %v323 = vsel %vm288, %v264, 0
      %v326 = vsel %vm288, %v265, 0
      %v329 = vsel %vm288, %v266, 0
      %v332 = vsel %vm288, %v267, 0
      %v335 = vsel %vm288, %v268, 0
      %v338 = vsel %vm288, %v269, 0
      %v341 = vsel %vm288, %v270, 0
      %v344 = vsel %vm288, %v271, 0
      %v347 = vsel %vm288, %v272, 0
      %v350 = vsel %vm288, %v273, 0
      %v353 = vsel %vm288, %v274, 0
      %v356 = vsel %vm288, %v275, 0
      %v359 = vsel %vm288, %v276, 0
      %v362 = vsel %vm288, %v277, 0
      %v365 = vsel %vm288, %v278, 0
      %v368 = vsel %vm288, %v279, 0
      %v371 = vsel %vm288, %v280, 0
      %v374 = vsel %vm288, %v281, 0
      %v377 = vsel %vm288, %v282, 0
      %vm379 = vcmask 1043456
      %v381 = vsel %vm379, %v283, 0
      %383 = vmatpush.msra.mxu0 0.0
      %384 = vmatpush.msra.mxu0 0.0
      %385 = vmatpush.msra.mxu0 0.0
      %386 = vmatpush.msra.mxu0 0.0
      %387 = vmatpush.msra.mxu0 0.0
      %388 = vmatpush.msra.mxu0 0.0
      %389 = vmatpush.msra.mxu0 0.0
      %390 = vmatpush.msra.mxu0 0.0
      %391 = vmatpush.msra.mxu0 0.0
      %392 = vmatpush.msra.mxu0 0.0
      %393 = vmatpush.msra.mxu0 0.0
      %394 = vmatpush.msra.mxu0 0.0
      %395 = vmatpush.msra.mxu0 0.0
      %396 = vmatpush.msra.mxu0 0.0
      %397 = vmatpush.msra.mxu0 0.0
      %398 = vmatpush.msra.mxu0 %v381
      %399 = vmatmul.f32.gmra.mxu0 %v290
      %v400 = vpop.f32.mrf.mxu0
      %v401 = vadd.f32 %v286, %v400
      %402 = vmatmul.f32.gmra.mxu0 %v293
      %v403 = vpop.f32.mrf.mxu0
      %v404 = vadd.f32 %v286, %v403
      %405 = vmatmul.f32.gmra.mxu0 %v296
      %v406 = vpop.f32.mrf.mxu0
      %v407 = vadd.f32 %v286, %v406
      %408 = vmatmul.f32.gmra.mxu0 %v299
      %v409 = vpop.f32.mrf.mxu0
      %v410 = vadd.f32 %v286, %v409
      %411 = vmatmul.f32.gmra.mxu0 %v302
      %v412 = vpop.f32.mrf.mxu0
      %v413 = vadd.f32 %v286, %v412
      %414 = vmatmul.f32.gmra.mxu0 %v305
      %v415 = vpop.f32.mrf.mxu0
      %v416 = vadd.f32 %v286, %v415
      %417 = vmatmul.f32.gmra.mxu0 %v308
      %v418 = vpop.f32.mrf.mxu0
      %v419 = vadd.f32 %v286, %v418
      %420 = vmatmul.f32.gmra.mxu0 %v311
      %v421 = vpop.f32.mrf.mxu0
      %v422 = vadd.f32 %v286, %v421
      %423 = vmatmul.f32.gmra.mxu0 %v314
      %v424 = vpop.f32.mrf.mxu0
      %v425 = vadd.f32 %v286, %v424
      %426 = vmatmul.f32.gmra.mxu0 %v317
      %v427 = vpop.f32.mrf.mxu0
      %v428 = vadd.f32 %v286, %v427
      %429 = vmatmul.f32.gmra.mxu0 %v320
      %v430 = vpop.f32.mrf.mxu0
      %v431 = vadd.f32 %v286, %v430
      %432 = vmatmul.f32.gmra.mxu0 %v323
      %v433 = vpop.f32.mrf.mxu0
      %v434 = vadd.f32 %v286, %v433
      %435 = vmatmul.f32.gmra.mxu0 %v326
      %v436 = vpop.f32.mrf.mxu0
      %v437 = vadd.f32 %v286, %v436
      %438 = vmatmul.f32.gmra.mxu0 %v329
      %v439 = vpop.f32.mrf.mxu0
      %v440 = vadd.f32 %v286, %v439
      %441 = vmatmul.f32.gmra.mxu0 %v332
      %v442 = vpop.f32.mrf.mxu0
      %v443 = vadd.f32 %v286, %v442
      %444 = vmatmul.f32.gmra.mxu0 %v335
      %v445 = vpop.f32.mrf.mxu0
      %v446 = vadd.f32 %v286, %v445
      %447 = vmatmul.f32.gmra.mxu0 %v338
      %v448 = vpop.f32.mrf.mxu0
      %v449 = vadd.f32 %v286, %v448
      %450 = vmatmul.f32.gmra.mxu0 %v341
      %v451 = vpop.f32.mrf.mxu0
      %v452 = vadd.f32 %v286, %v451
      %453 = vmatmul.f32.gmra.mxu0 %v344
      %v454 = vpop.f32.mrf.mxu0
      %v455 = vadd.f32 %v286, %v454
      %456 = vmatmul.f32.gmra.mxu0 %v347
      %v457 = vpop.f32.mrf.mxu0
      %v458 = vadd.f32 %v286, %v457
      %459 = vmatmul.f32.gmra.mxu0 %v350
      %v460 = vpop.f32.mrf.mxu0
      %v461 = vadd.f32 %v286, %v460
      %462 = vmatmul.f32.gmra.mxu0 %v353
      %v463 = vpop.f32.mrf.mxu0
      %v464 = vadd.f32 %v286, %v463
      %465 = vmatmul.f32.gmra.mxu0 %v356
      %v466 = vpop.f32.mrf.mxu0
      %v467 = vadd.f32 %v286, %v466
      %468 = vmatmul.f32.gmra.mxu0 %v359
      %v469 = vpop.f32.mrf.mxu0
      %v470 = vadd.f32 %v286, %v469
      %471 = vmatmul.f32.gmra.mxu0 %v362
      %v472 = vpop.f32.mrf.mxu0
      %v473 = vadd.f32 %v286, %v472
      %474 = vmatmul.f32.gmra.mxu0 %v365
      %v475 = vpop.f32.mrf.mxu0
      %v476 = vadd.f32 %v286, %v475
      %477 = vmatmul.f32.gmra.mxu0 %v368
      %v478 = vpop.f32.mrf.mxu0
      %v479 = vadd.f32 %v286, %v478
      %480 = vmatmul.f32.gmra.mxu0 %v371
      %v481 = vpop.f32.mrf.mxu0
      %v482 = vadd.f32 %v286, %v481
      %483 = vmatmul.f32.gmra.mxu0 %v374
      %v484 = vpop.f32.mrf.mxu0
      %v485 = vadd.f32 %v286, %v484
      %486 = vmatmul.f32.gmra.mxu0 %v377
      %v487 = vpop.f32.mrf.mxu0
      %v488 = vadd.f32 %v286, %v487
      %489 = vdwg.mxu0
      %v490 = vmax.f32 %v401, 0.0
      %v491 = vmax.f32 %v404, 0.0
      %v492 = vmax.f32 %v407, 0.0
      %v493 = vmax.f32 %v410, 0.0
      %v494 = vmax.f32 %v413, 0.0
      %v495 = vmax.f32 %v416, 0.0
      %v496 = vmax.f32 %v419, 0.0
      %v497 = vmax.f32 %v422, 0.0
      %v498 = vmax.f32 %v425, 0.0
      %v499 = vmax.f32 %v428, 0.0
      %v500 = vmax.f32 %v431, 0.0
      %v501 = vmax.f32 %v434, 0.0
      %v502 = vmax.f32 %v437, 0.0
      %v503 = vmax.f32 %v440, 0.0
      %v504 = vmax.f32 %v443, 0.0
      %v505 = vmax.f32 %v446, 0.0
      %v506 = vmax.f32 %v449, 0.0
      %v507 = vmax.f32 %v452, 0.0
      %v508 = vmax.f32 %v455, 0.0
      %v509 = vmax.f32 %v458, 0.0
      %v510 = vmax.f32 %v461, 0.0
      %v511 = vmax.f32 %v464, 0.0
      %v512 = vmax.f32 %v467, 0.0
      %v513 = vmax.f32 %v470, 0.0
      %v514 = vmax.f32 %v473, 0.0
      %v515 = vmax.f32 %v476, 0.0
      %v516 = vmax.f32 %v479, 0.0
      %v517 = vmax.f32 %v482, 0.0
      %v518 = vmax.f32 %v485, 0.0
      %v519 = vmax.f32 %v488, 0.0
      %v520 = vstv %s250
      %v521 = vadd.s32 %v520, 1
      %v522 = vadd.s32 %v520, 2
      %v523 = vadd.s32 %v520, 3
      %v524 = vadd.s32 %v520, 4
      %v525 = vadd.s32 %v520, 5
      %v526 = vadd.s32 %v520, 6
      %v527 = vadd.s32 %v520, 7
      %v528 = vadd.s32 %v520, 8
      %v529 = vadd.s32 %v520, 9
      %v530 = vlaneseq
      %v531 = vshrl.u32 %v530, 7
      %v532 = vadd.s32 %v531, 8
      %v533 = vadd.s32 %v531, 16
      %vm534 = vcmp.gt.s32.totalorder %v520, 0
      %vm535 = vcmp.gt.s32.totalorder %v521, 0
      %vm536 = vcmp.gt.s32.totalorder %v522, 0
      %vm537 = vcmp.gt.s32.totalorder %v523, 0
      %vm538 = vcmp.gt.s32.totalorder %v524, 0
      %vm539 = vcmp.gt.s32.totalorder %v525, 0
      %vm540 = vcmp.gt.s32.totalorder %v526, 0
      %vm541 = vcmp.gt.s32.totalorder %v527, 0
      %vm542 = vcmp.gt.s32.totalorder %v528, 0
      %vm543 = vcmp.gt.s32.totalorder %v529, 0
      %vm544 = vcmp.lt.s32.totalorder %v520, 17
      %vm545 = vcmp.lt.s32.totalorder %v521, 17
      %vm546 = vcmp.lt.s32.totalorder %v522, 17
      %vm547 = vcmp.lt.s32.totalorder %v523, 17
      %vm548 = vcmp.lt.s32.totalorder %v524, 17
      %vm549 = vcmp.lt.s32.totalorder %v525, 17
      %vm550 = vcmp.lt.s32.totalorder %v526, 17
      %vm551 = vcmp.lt.s32.totalorder %v527, 17
      %vm552 = vcmp.lt.s32.totalorder %v528, 17
      %vm553 = vcmp.lt.s32.totalorder %v529, 17
      %vm554 = vmand %vm534, %vm544
      %vm555 = vmand %vm535, %vm545
      %vm556 = vmand %vm536, %vm546
      %vm557 = vmand %vm537, %vm547
      %vm558 = vmand %vm538, %vm548
      %vm559 = vmand %vm539, %vm549
      %vm560 = vmand %vm540, %vm550
      %vm561 = vmand %vm541, %vm551
      %vm562 = vmand %vm542, %vm552
      %vm563 = vmand %vm543, %vm553
      %vm564 = vcmp.gt.s32.totalorder %v531, 0
      %vm565 = vcmp.gt.s32.totalorder %v532, 0
      %vm566 = vcmp.gt.s32.totalorder %v533, 0
      %vm567 = vmand %vm554, %vm564
      %vm568 = vmand %vm554, %vm565
      %vm569 = vmand %vm554, %vm566
      %vm570 = vmand %vm555, %vm564
      %vm571 = vmand %vm555, %vm565
      %vm572 = vmand %vm555, %vm566
      %vm573 = vmand %vm556, %vm564
      %vm574 = vmand %vm556, %vm565
      %vm575 = vmand %vm556, %vm566
      %vm576 = vmand %vm557, %vm564
      %vm577 = vmand %vm557, %vm565
      %vm578 = vmand %vm557, %vm566
      %vm579 = vmand %vm558, %vm564
      %vm580 = vmand %vm558, %vm565
      %vm581 = vmand %vm558, %vm566
      %vm582 = vmand %vm559, %vm564
      %vm583 = vmand %vm559, %vm565
      %vm584 = vmand %vm559, %vm566
      %vm585 = vmand %vm560, %vm564
      %vm586 = vmand %vm560, %vm565
      %vm587 = vmand %vm560, %vm566
      %vm588 = vmand %vm561, %vm564
      %vm589 = vmand %vm561, %vm565
      %vm590 = vmand %vm561, %vm566
      %vm591 = vmand %vm562, %vm564
      %vm592 = vmand %vm562, %vm565
      %vm593 = vmand %vm562, %vm566
      %vm594 = vmand %vm563, %vm564
      %vm595 = vmand %vm563, %vm565
      %vm596 = vmand %vm563, %vm566
      %vm597 = vcmp.le.s32.totalorder %v531, 16
      %vm598 = vcmp.le.s32.totalorder %v532, 16
      %vm599 = vcmp.le.s32.totalorder %v533, 16
      %vm600 = vmand %vm567, %vm597
      %vm601 = vmand %vm568, %vm598
      %vm602 = vmand %vm569, %vm599
      %vm603 = vmand %vm570, %vm597
      %vm604 = vmand %vm571, %vm598
      %vm605 = vmand %vm572, %vm599
      %vm606 = vmand %vm573, %vm597
      %vm607 = vmand %vm574, %vm598
      %vm608 = vmand %vm575, %vm599
      %vm609 = vmand %vm576, %vm597
      %vm610 = vmand %vm577, %vm598
      %vm611 = vmand %vm578, %vm599
      %vm612 = vmand %vm579, %vm597
      %vm613 = vmand %vm580, %vm598
      %vm614 = vmand %vm581, %vm599
      %vm615 = vmand %vm582, %vm597
      %vm616 = vmand %vm583, %vm598
      %vm617 = vmand %vm584, %vm599
      %vm618 = vmand %vm585, %vm597
      %vm619 = vmand %vm586, %vm598
      %vm620 = vmand %vm587, %vm599
      %vm621 = vmand %vm588, %vm597
      %vm622 = vmand %vm589, %vm598
      %vm623 = vmand %vm590, %vm599
      %vm624 = vmand %vm591, %vm597
      %vm625 = vmand %vm592, %vm598
      %vm626 = vmand %vm593, %vm599
      %vm627 = vmand %vm594, %vm597
      %vm628 = vmand %vm595, %vm598
      %vm629 = vmand %vm596, %vm599
      %v630 = vsel %vm600, %v490, 0.0
      %v631 = vsel %vm601, %v491, 0.0
      %v632 = vsel %vm602, %v492, 0.0
      %v633 = vsel %vm603, %v493, 0.0
      %v634 = vsel %vm604, %v494, 0.0
      %v635 = vsel %vm605, %v495, 0.0
      %v636 = vsel %vm606, %v496, 0.0
      %v637 = vsel %vm607, %v497, 0.0
      %v638 = vsel %vm608, %v498, 0.0
      %v639 = vsel %vm609, %v499, 0.0
      %v640 = vsel %vm610, %v500, 0.0
      %v641 = vsel %vm611, %v501, 0.0
      %v642 = vsel %vm612, %v502, 0.0
      %v643 = vsel %vm613, %v503, 0.0
      %v644 = vsel %vm614, %v504, 0.0
      %v645 = vsel %vm615, %v505, 0.0
      %v646 = vsel %vm616, %v506, 0.0
      %v647 = vsel %vm617, %v507, 0.0
      %v648 = vsel %vm618, %v508, 0.0
      %v649 = vsel %vm619, %v509, 0.0
      %v650 = vsel %vm620, %v510, 0.0
      %v651 = vsel %vm621, %v511, 0.0
      %v652 = vsel %vm622, %v512, 0.0
      %v653 = vsel %vm623, %v513, 0.0
      %v654 = vsel %vm624, %v514, 0.0
      %v655 = vsel %vm625, %v515, 0.0
      %v656 = vsel %vm626, %v516, 0.0
      %v657 = vsel %vm627, %v517, 0.0
      %v658 = vsel %vm628, %v518, 0.0
      %v659 = vsel %vm629, %v519, 0.0
      %vm690 = vcmask 1046528
      %v691 = vrot.slane %v630, 1
      %v692 = vrot.slane %v631, 1
      %v693 = vsel %vm690, %v691, %v692
      %v694 = vrot.slane %v632, 1
      %v695 = vsel %vm690, %v692, %v694
      %v696 = vrot.slane %v633, 1
      %v697 = vrot.slane %v634, 1
      %v698 = vsel %vm690, %v696, %v697
      %v699 = vrot.slane %v635, 1
      %v700 = vsel %vm690, %v697, %v699
      %v701 = vrot.slane %v636, 1
      %v702 = vrot.slane %v637, 1
      %v703 = vsel %vm690, %v701, %v702
      %v704 = vrot.slane %v638, 1
      %v705 = vsel %vm690, %v702, %v704
      %v706 = vrot.slane %v639, 1
      %v707 = vrot.slane %v640, 1
      %v708 = vsel %vm690, %v706, %v707
      %v709 = vrot.slane %v641, 1
      %v710 = vsel %vm690, %v707, %v709
      %v711 = vrot.slane %v642, 1
      %v712 = vrot.slane %v643, 1
      %v713 = vsel %vm690, %v711, %v712
      %v714 = vrot.slane %v644, 1
      %v715 = vsel %vm690, %v712, %v714
      %v716 = vrot.slane %v645, 1
      %v717 = vrot.slane %v646, 1
      %v718 = vsel %vm690, %v716, %v717
      %v719 = vrot.slane %v647, 1
      %v720 = vsel %vm690, %v717, %v719
      %v721 = vrot.slane %v648, 1
      %v722 = vrot.slane %v649, 1
      %v723 = vsel %vm690, %v721, %v722
      %v724 = vrot.slane %v650, 1
      %v725 = vsel %vm690, %v722, %v724
      %v726 = vrot.slane %v651, 1
      %v727 = vrot.slane %v652, 1
      %v728 = vsel %vm690, %v726, %v727
      %v729 = vrot.slane %v653, 1
      %v730 = vsel %vm690, %v727, %v729
      %v731 = vrot.slane %v654, 1
      %v732 = vrot.slane %v655, 1
      %v733 = vsel %vm690, %v731, %v732
      %v734 = vrot.slane %v656, 1
      %v735 = vsel %vm690, %v732, %v734
      %v736 = vrot.slane %v657, 1
      %v737 = vrot.slane %v658, 1
      %v738 = vsel %vm690, %v736, %v737
      %v739 = vrot.slane %v659, 1
      %v740 = vsel %vm690, %v737, %v739
      %v751 = vsel %vm690, %v694, 0.0
      %v752 = vsel %vm690, %v699, 0.0
      %v753 = vsel %vm690, %v704, 0.0
      %v754 = vsel %vm690, %v709, 0.0
      %v755 = vsel %vm690, %v714, 0.0
      %v756 = vsel %vm690, %v719, 0.0
      %v757 = vsel %vm690, %v724, 0.0
      %v758 = vsel %vm690, %v729, 0.0
      %v759 = vsel %vm690, %v734, 0.0
      %v760 = vsel %vm690, %v739, 0.0
      %vm761 = vcmask 1045504
      %v762 = vrot.slane %v630, 2
      %v763 = vrot.slane %v631, 2
      %v764 = vsel %vm761, %v762, %v763
      %v765 = vrot.slane %v632, 2
      %v766 = vsel %vm761, %v763, %v765
      %v767 = vrot.slane %v633, 2
      %v768 = vrot.slane %v634, 2
      %v769 = vsel %vm761, %v767, %v768
      %v770 = vrot.slane %v635, 2
      %v771 = vsel %vm761, %v768, %v770
      %v772 = vrot.slane %v636, 2
      %v773 = vrot.slane %v637, 2
      %v774 = vsel %vm761, %v772, %v773
      %v775 = vrot.slane %v638, 2
      %v776 = vsel %vm761, %v773, %v775
      %v777 = vrot.slane %v639, 2
      %v778 = vrot.slane %v640, 2
      %v779 = vsel %vm761, %v777, %v778
      %v780 = vrot.slane %v641, 2
      %v781 = vsel %vm761, %v778, %v780
      %v782 = vrot.slane %v642, 2
      %v783 = vrot.slane %v643, 2
      %v784 = vsel %vm761, %v782, %v783
      %v785 = vrot.slane %v644, 2
      %v786 = vsel %vm761, %v783, %v785
      %v787 = vrot.slane %v645, 2
      %v788 = vrot.slane %v646, 2
      %v789 = vsel %vm761, %v787, %v788
      %v790 = vrot.slane %v647, 2
      %v791 = vsel %vm761, %v788, %v790
      %v792 = vrot.slane %v648, 2
      %v793 = vrot.slane %v649, 2
      %v794 = vsel %vm761, %v792, %v793
      %v795 = vrot.slane %v650, 2
      %v796 = vsel %vm761, %v793, %v795
      %v797 = vrot.slane %v651, 2
      %v798 = vrot.slane %v652, 2
      %v799 = vsel %vm761, %v797, %v798
      %v800 = vrot.slane %v653, 2
      %v801 = vsel %vm761, %v798, %v800
      %v802 = vrot.slane %v654, 2
      %v803 = vrot.slane %v655, 2
      %v804 = vsel %vm761, %v802, %v803
      %v805 = vrot.slane %v656, 2
      %v806 = vsel %vm761, %v803, %v805
      %v807 = vrot.slane %v657, 2
      %v808 = vrot.slane %v658, 2
      %v809 = vsel %vm761, %v807, %v808
      %v810 = vrot.slane %v659, 2
      %v811 = vsel %vm761, %v808, %v810
      %v822 = vsel %vm761, %v765, 0.0
      %v823 = vsel %vm761, %v770, 0.0
      %v824 = vsel %vm761, %v775, 0.0
      %v825 = vsel %vm761, %v780, 0.0
      %v826 = vsel %vm761, %v785, 0.0
      %v827 = vsel %vm761, %v790, 0.0
      %v828 = vsel %vm761, %v795, 0.0
      %v829 = vsel %vm761, %v800, 0.0
      %v830 = vsel %vm761, %v805, 0.0
      %v831 = vsel %vm761, %v810, 0.0
      %842 = vrot.lane.b32.xlu0 %v693, 4
      %v843 = vpop.permute.xlu0 %842
      %844 = vrot.lane.b32.xlu0 %v695, 4
      %v845 = vpop.permute.xlu0 %844
      %846 = vrot.lane.b32.xlu0 %v751, 4
      %v847 = vpop.permute.xlu0 %846
      %848 = vrot.lane.b32.xlu0 %v698, 4
      %v849 = vpop.permute.xlu0 %848
      %850 = vrot.lane.b32.xlu0 %v700, 4
      %v851 = vpop.permute.xlu0 %850
      %852 = vrot.lane.b32.xlu0 %v752, 4
      %v853 = vpop.permute.xlu0 %852
      %854 = vrot.lane.b32.xlu0 %v703, 4
      %v855 = vpop.permute.xlu0 %854
      %856 = vrot.lane.b32.xlu0 %v705, 4
      %v857 = vpop.permute.xlu0 %856
      %858 = vrot.lane.b32.xlu0 %v753, 4
      %v859 = vpop.permute.xlu0 %858
      %860 = vrot.lane.b32.xlu0 %v708, 4
      %v861 = vpop.permute.xlu0 %860
      %862 = vrot.lane.b32.xlu0 %v710, 4
      %v863 = vpop.permute.xlu0 %862
      %864 = vrot.lane.b32.xlu0 %v754, 4
      %v865 = vpop.permute.xlu0 %864
      %866 = vrot.lane.b32.xlu0 %v713, 4
      %v867 = vpop.permute.xlu0 %866
      %868 = vrot.lane.b32.xlu0 %v715, 4
      %v869 = vpop.permute.xlu0 %868
      %870 = vrot.lane.b32.xlu0 %v755, 4
      %v871 = vpop.permute.xlu0 %870
      %872 = vrot.lane.b32.xlu0 %v718, 4
      %v873 = vpop.permute.xlu0 %872
      %874 = vrot.lane.b32.xlu0 %v720, 4
      %v875 = vpop.permute.xlu0 %874
      %876 = vrot.lane.b32.xlu0 %v756, 4
      %v877 = vpop.permute.xlu0 %876
      %878 = vrot.lane.b32.xlu0 %v723, 4
      %v879 = vpop.permute.xlu0 %878
      %880 = vrot.lane.b32.xlu0 %v725, 4
      %v881 = vpop.permute.xlu0 %880
      %882 = vrot.lane.b32.xlu0 %v757, 4
      %v883 = vpop.permute.xlu0 %882
      %884 = vrot.lane.b32.xlu0 %v728, 4
      %v885 = vpop.permute.xlu0 %884
      %886 = vrot.lane.b32.xlu0 %v730, 4
      %v887 = vpop.permute.xlu0 %886
      %888 = vrot.lane.b32.xlu0 %v758, 4
      %v889 = vpop.permute.xlu0 %888
      %890 = vrot.lane.b32.xlu0 %v733, 4
      %v891 = vpop.permute.xlu0 %890
      %892 = vrot.lane.b32.xlu0 %v735, 4
      %v893 = vpop.permute.xlu0 %892
      %894 = vrot.lane.b32.xlu0 %v759, 4
      %v895 = vpop.permute.xlu0 %894
      %896 = vrot.lane.b32.xlu0 %v738, 4
      %v897 = vpop.permute.xlu0 %896
      %898 = vrot.lane.b32.xlu0 %v740, 4
      %v899 = vpop.permute.xlu0 %898
      %900 = vrot.lane.b32.xlu0 %v760, 4
      %v901 = vpop.permute.xlu0 %900
      %942 = vrot.lane.b32.xlu0 %v764, 8
      %v943 = vpop.permute.xlu0 %942
      %944 = vrot.lane.b32.xlu0 %v766, 8
      %v945 = vpop.permute.xlu0 %944
      %946 = vrot.lane.b32.xlu0 %v822, 8
      %v947 = vpop.permute.xlu0 %946
      %948 = vrot.lane.b32.xlu0 %v769, 8
      %v949 = vpop.permute.xlu0 %948
      %950 = vrot.lane.b32.xlu0 %v771, 8
      %v951 = vpop.permute.xlu0 %950
      %952 = vrot.lane.b32.xlu0 %v823, 8
      %v953 = vpop.permute.xlu0 %952
      %954 = vrot.lane.b32.xlu0 %v774, 8
      %v955 = vpop.permute.xlu0 %954
      %956 = vrot.lane.b32.xlu0 %v776, 8
      %v957 = vpop.permute.xlu0 %956
      %958 = vrot.lane.b32.xlu0 %v824, 8
      %v959 = vpop.permute.xlu0 %958
      %960 = vrot.lane.b32.xlu0 %v779, 8
      %v961 = vpop.permute.xlu0 %960
      %962 = vrot.lane.b32.xlu0 %v781, 8
      %v963 = vpop.permute.xlu0 %962
      %964 = vrot.lane.b32.xlu0 %v825, 8
      %v965 = vpop.permute.xlu0 %964
      %966 = vrot.lane.b32.xlu0 %v784, 8
      %v967 = vpop.permute.xlu0 %966
      %968 = vrot.lane.b32.xlu0 %v786, 8
      %v969 = vpop.permute.xlu0 %968
      %970 = vrot.lane.b32.xlu0 %v826, 8
      %v971 = vpop.permute.xlu0 %970
      %972 = vrot.lane.b32.xlu0 %v789, 8
      %v973 = vpop.permute.xlu0 %972
      %974 = vrot.lane.b32.xlu0 %v791, 8
      %v975 = vpop.permute.xlu0 %974
      %976 = vrot.lane.b32.xlu0 %v827, 8
      %v977 = vpop.permute.xlu0 %976
      %978 = vrot.lane.b32.xlu0 %v794, 8
      %v979 = vpop.permute.xlu0 %978
      %980 = vrot.lane.b32.xlu0 %v796, 8
      %v981 = vpop.permute.xlu0 %980
      %982 = vrot.lane.b32.xlu0 %v828, 8
      %v983 = vpop.permute.xlu0 %982
      %984 = vrot.lane.b32.xlu0 %v799, 8
      %v985 = vpop.permute.xlu0 %984
      %986 = vrot.lane.b32.xlu0 %v801, 8
      %v987 = vpop.permute.xlu0 %986
      %988 = vrot.lane.b32.xlu0 %v829, 8
      %v989 = vpop.permute.xlu0 %988
      %990 = vrot.lane.b32.xlu0 %v804, 8
      %v991 = vpop.permute.xlu0 %990
      %992 = vrot.lane.b32.xlu0 %v806, 8
      %v993 = vpop.permute.xlu0 %992
      %994 = vrot.lane.b32.xlu0 %v830, 8
      %v995 = vpop.permute.xlu0 %994
      %996 = vrot.lane.b32.xlu0 %v809, 8
      %v997 = vpop.permute.xlu0 %996
      %998 = vrot.lane.b32.xlu0 %v811, 8
      %v999 = vpop.permute.xlu0 %998
      %1000 = vrot.lane.b32.xlu0 %v831, 8
      %v1001 = vpop.permute.xlu0 %1000
      %v1032 = vsel %vm288, %v630, %v843
      %v1033 = vsel %vm288, %v631, %v845
      %v1034 = vsel %vm288, %v632, %v847
      %v1035 = vsel %vm288, %v633, %v849
      %v1036 = vsel %vm288, %v634, %v851
      %v1037 = vsel %vm288, %v635, %v853
      %v1038 = vsel %vm288, %v636, %v855
      %v1039 = vsel %vm288, %v637, %v857
      %v1040 = vsel %vm288, %v638, %v859
      %v1041 = vsel %vm288, %v639, %v861
      %v1042 = vsel %vm288, %v640, %v863
      %v1043 = vsel %vm288, %v641, %v865
      %v1044 = vsel %vm288, %v642, %v867
      %v1045 = vsel %vm288, %v643, %v869
      %v1046 = vsel %vm288, %v644, %v871
      %v1047 = vsel %vm288, %v645, %v873
      %v1048 = vsel %vm288, %v646, %v875
      %v1049 = vsel %vm288, %v647, %v877
      %v1050 = vsel %vm288, %v648, %v879
      %v1051 = vsel %vm288, %v649, %v881
      %v1052 = vsel %vm288, %v650, %v883
      %v1053 = vsel %vm288, %v651, %v885
      %v1054 = vsel %vm288, %v652, %v887
      %v1055 = vsel %vm288, %v653, %v889
      %v1056 = vsel %vm288, %v654, %v891
      %v1057 = vsel %vm288, %v655, %v893
      %v1058 = vsel %vm288, %v656, %v895
      %v1059 = vsel %vm288, %v657, %v897
      %v1060 = vsel %vm288, %v658, %v899
      %v1061 = vsel %vm288, %v659, %v901
      %vm1062 = vcmask 64512
      %v1063 = vsel %vm1062, %v1032, %v943
      %v1064 = vsel %vm1062, %v1033, %v945
      %v1065 = vsel %vm1062, %v1034, %v947
      %v1066 = vsel %vm1062, %v1035, %v949
      %v1067 = vsel %vm1062, %v1036, %v951
      %v1068 = vsel %vm1062, %v1037, %v953
      %v1069 = vsel %vm1062, %v1038, %v955
      %v1070 = vsel %vm1062, %v1039, %v957
      %v1071 = vsel %vm1062, %v1040, %v959
      %v1072 = vsel %vm1062, %v1041, %v961
      %v1073 = vsel %vm1062, %v1042, %v963
      %v1074 = vsel %vm1062, %v1043, %v965
      %v1075 = vsel %vm1062, %v1044, %v967
      %v1076 = vsel %vm1062, %v1045, %v969
      %v1077 = vsel %vm1062, %v1046, %v971
      %v1078 = vsel %vm1062, %v1047, %v973
      %v1079 = vsel %vm1062, %v1048, %v975
      %v1080 = vsel %vm1062, %v1049, %v977
      %v1081 = vsel %vm1062, %v1050, %v979
      %v1082 = vsel %vm1062, %v1051, %v981
      %v1083 = vsel %vm1062, %v1052, %v983
      %v1084 = vsel %vm1062, %v1053, %v985
      %v1085 = vsel %vm1062, %v1054, %v987
      %v1086 = vsel %vm1062, %v1055, %v989
      %v1087 = vsel %vm1062, %v1056, %v991
      %v1088 = vsel %vm1062, %v1057, %v993
      %v1089 = vsel %vm1062, %v1058, %v995
      %v1090 = vsel %vm1062, %v1059, %v997
      %v1091 = vsel %vm1062, %v1060, %v999
      %v1092 = vsel %vm1062, %v1061, %v1001
      %vm1093 = vcmask 97280
      %1094 = vst.msk [vmem:[#allocation2] sm:$0xff] %vm1093, %v1063
      %1095 = vst.msk [vmem:[#allocation2 + $0x8] sm:$0xff] %vm1093, %v1064
      %1096 = vst.msk [vmem:[#allocation2 + $0x10] sm:$0xff] %vm1093, %v1065
      %1097 = vst.msk [vmem:[#allocation2 + $0x18] sm:$0xff] %vm1093, %v1066
      %1098 = vst.msk [vmem:[#allocation2 + $0x20] sm:$0xff] %vm1093, %v1067
      %1099 = vst.msk [vmem:[#allocation2 + $0x28] sm:$0xff] %vm1093, %v1068
      %1100 = vst.msk [vmem:[#allocation2 + $0x30] sm:$0xff] %vm1093, %v1069
      %1101 = vst.msk [vmem:[#allocation2 + $0x38] sm:$0xff] %vm1093, %v1070
      %1102 = vst.msk [vmem:[#allocation2 + $0x40] sm:$0xff] %vm1093, %v1071
      %1103 = vst.msk [vmem:[#allocation2 + $0x48] sm:$0xff] %vm1093, %v1072
      %1104 = vst.msk [vmem:[#allocation2 + $0x50] sm:$0xff] %vm1093, %v1073
      %1105 = vst.msk [vmem:[#allocation2 + $0x58] sm:$0xff] %vm1093, %v1074
      %1106 = vst.msk [vmem:[#allocation2 + $0x60] sm:$0xff] %vm1093, %v1075
      %1107 = vst.msk [vmem:[#allocation2 + $0x68] sm:$0xff] %vm1093, %v1076
      %1108 = vst.msk [vmem:[#allocation2 + $0x70] sm:$0xff] %vm1093, %v1077
      %1109 = vst.msk [vmem:[#allocation2 + $0x78] sm:$0xff] %vm1093, %v1078
      %1110 = vst.msk [vmem:[#allocation2 + $0x80] sm:$0xff] %vm1093, %v1079
      %1111 = vst.msk [vmem:[#allocation2 + $0x88] sm:$0xff] %vm1093, %v1080
      %1112 = vst.msk [vmem:[#allocation2 + $0x90] sm:$0xff] %vm1093, %v1081
      %1113 = vst.msk [vmem:[#allocation2 + $0x98] sm:$0xff] %vm1093, %v1082
      %1114 = vst.msk [vmem:[#allocation2 + $0xa0] sm:$0xff] %vm1093, %v1083
      %1115 = vst.msk [vmem:[#allocation2 + $0xa8] sm:$0xff] %vm1093, %v1084
      %1116 = vst.msk [vmem:[#allocation2 + $0xb0] sm:$0xff] %vm1093, %v1085
      %1117 = vst.msk [vmem:[#allocation2 + $0xb8] sm:$0xff] %vm1093, %v1086
      %1118 = vst.msk [vmem:[#allocation2 + $0xc0] sm:$0xff] %vm1093, %v1087
      %1119 = vst.msk [vmem:[#allocation2 + $0xc8] sm:$0xff] %vm1093, %v1088
      %1120 = vst.msk [vmem:[#allocation2 + $0xd0] sm:$0xff] %vm1093, %v1089
      %1121 = vst.msk [vmem:[#allocation2 + $0xd8] sm:$0xff] %vm1093, %v1090
      %1122 = vst.msk [vmem:[#allocation2 + $0xe0] sm:$0xff] %vm1093, %v1091
      %1123 = vst.msk [vmem:[#allocation2 + $0xe8] sm:$0xff] %vm1093, %v1092
      %v1124 = vld [vmem:[#allocation2] sm:$0xff]
      %v1125 = vld [vmem:[#allocation2 + $0x8] sm:$0xff]
      %v1126 = vld [vmem:[#allocation2 + $0x10] sm:$0xff]
      %v1127 = vld [vmem:[#allocation2 + $0x18] sm:$0xff]
      %v1128 = vld [vmem:[#allocation2 + $0x20] sm:$0xff]
      %v1129 = vld [vmem:[#allocation2 + $0x28] sm:$0xff]
      %v1130 = vld [vmem:[#allocation2 + $0x30] sm:$0xff]
      %v1131 = vld [vmem:[#allocation2 + $0x38] sm:$0xff]
      %v1132 = vld [vmem:[#allocation2 + $0x40] sm:$0xff]
      %v1133 = vld [vmem:[#allocation2 + $0x48] sm:$0xff]
      %v1134 = vld [vmem:[#allocation2 + $0x50] sm:$0xff]
      %v1135 = vld [vmem:[#allocation2 + $0x58] sm:$0xff]
      %v1136 = vld [vmem:[#allocation2 + $0x60] sm:$0xff]
      %v1137 = vld [vmem:[#allocation2 + $0x68] sm:$0xff]
      %v1138 = vld [vmem:[#allocation2 + $0x70] sm:$0xff]
      %v1139 = vld [vmem:[#allocation2 + $0x78] sm:$0xff]
      %v1140 = vld [vmem:[#allocation2 + $0x80] sm:$0xff]
      %v1141 = vld [vmem:[#allocation2 + $0x88] sm:$0xff]
      %v1142 = vld [vmem:[#allocation2 + $0x90] sm:$0xff]
      %v1143 = vld [vmem:[#allocation2 + $0x98] sm:$0xff]
      %v1144 = vld [vmem:[#allocation2 + $0xa0] sm:$0xff]
      %v1145 = vld [vmem:[#allocation2 + $0xa8] sm:$0xff]
      %v1146 = vld [vmem:[#allocation2 + $0xb0] sm:$0xff]
      %v1147 = vld [vmem:[#allocation2 + $0xb8] sm:$0xff]
      %v1148 = vld [vmem:[%s3] sm:$0xff]
      %v1149 = vld [vmem:[%s3 + $0x8] sm:$0xf]
      %v1151 = vsel %vm1093, %v1124, 0
      %v1154 = vsel %vm1093, %v1125, 0
      %v1157 = vsel %vm1093, %v1126, 0
      %v1160 = vsel %vm1093, %v1127, 0
      %v1163 = vsel %vm1093, %v1128, 0
      %v1166 = vsel %vm1093, %v1129, 0
      %v1169 = vsel %vm1093, %v1130, 0
      %v1172 = vsel %vm1093, %v1131, 0
      %v1175 = vsel %vm1093, %v1132, 0
      %v1178 = vsel %vm1093, %v1133, 0
      %v1181 = vsel %vm1093, %v1134, 0
      %v1184 = vsel %vm1093, %v1135, 0
      %v1187 = vsel %vm1093, %v1136, 0
      %v1190 = vsel %vm1093, %v1137, 0
      %v1193 = vsel %vm1093, %v1138, 0
      %v1196 = vsel %vm1093, %v1139, 0
      %v1199 = vsel %vm1093, %v1140, 0
      %v1202 = vsel %vm1093, %v1141, 0
      %v1205 = vsel %vm1093, %v1142, 0
      %v1208 = vsel %vm1093, %v1143, 0
      %v1211 = vsel %vm1093, %v1144, 0
      %v1214 = vsel %vm1093, %v1145, 0
      %v1217 = vsel %vm1093, %v1146, 0
      %v1220 = vsel %vm1093, %v1147, 0
      %v1223 = vsel %vm379, %v1149, 0
      %1225 = vmatpush.msra.mxu0 0.0
      %1226 = vmatpush.msra.mxu0 0.0
      %1227 = vmatpush.msra.mxu0 0.0
      %1228 = vmatpush.msra.mxu0 0.0
      %1229 = vmatpush.msra.mxu0 0.0
      %1230 = vmatpush.msra.mxu0 0.0
      %1231 = vmatpush.msra.mxu0 0.0
      %1232 = vmatpush.msra.mxu0 0.0
      %1233 = vmatpush.msra.mxu0 0.0
      %1234 = vmatpush.msra.mxu0 0.0
      %1235 = vmatpush.msra.mxu0 0.0
      %1236 = vmatpush.msra.mxu0 0.0
      %1237 = vmatpush.msra.mxu0 0.0
      %1238 = vmatpush.msra.mxu0 0.0
      %1239 = vmatpush.msra.mxu0 %v1223
      %1240 = vmatpush.msra.mxu0 %v1148
      %1241 = vmatmul.f32.gmra.mxu0 %v1151
      %v1242 = vpop.f32.mrf.mxu0
      %v1243 = vadd.f32 0.0, %v1242
      %1244 = vmatmul.f32.gmra.mxu0 %v1154
      %v1245 = vpop.f32.mrf.mxu0
      %v1246 = vadd.f32 0.0, %v1245
      %1247 = vmatmul.f32.gmra.mxu0 %v1157
      %v1248 = vpop.f32.mrf.mxu0
      %v1249 = vadd.f32 0.0, %v1248
      %1250 = vmatmul.f32.gmra.mxu0 %v1160
      %v1251 = vpop.f32.mrf.mxu0
      %v1252 = vadd.f32 0.0, %v1251
      %1253 = vmatmul.f32.gmra.mxu0 %v1163
      %v1254 = vpop.f32.mrf.mxu0
      %v1255 = vadd.f32 0.0, %v1254
      %1256 = vmatmul.f32.gmra.mxu0 %v1166
      %v1257 = vpop.f32.mrf.mxu0
      %v1258 = vadd.f32 0.0, %v1257
      %1259 = vmatmul.f32.gmra.mxu0 %v1169
      %v1260 = vpop.f32.mrf.mxu0
      %v1261 = vadd.f32 0.0, %v1260
      %1262 = vmatmul.f32.gmra.mxu0 %v1172
      %v1263 = vpop.f32.mrf.mxu0
      %v1264 = vadd.f32 0.0, %v1263
      %1265 = vmatmul.f32.gmra.mxu0 %v1175
      %v1266 = vpop.f32.mrf.mxu0
      %v1267 = vadd.f32 0.0, %v1266
      %1268 = vmatmul.f32.gmra.mxu0 %v1178
      %v1269 = vpop.f32.mrf.mxu0
      %v1270 = vadd.f32 0.0, %v1269
      %1271 = vmatmul.f32.gmra.mxu0 %v1181
      %v1272 = vpop.f32.mrf.mxu0
      %v1273 = vadd.f32 0.0, %v1272
      %1274 = vmatmul.f32.gmra.mxu0 %v1184
      %v1275 = vpop.f32.mrf.mxu0
      %v1276 = vadd.f32 0.0, %v1275
      %1277 = vmatmul.f32.gmra.mxu0 %v1187
      %v1278 = vpop.f32.mrf.mxu0
      %v1279 = vadd.f32 0.0, %v1278
      %1280 = vmatmul.f32.gmra.mxu0 %v1190
      %v1281 = vpop.f32.mrf.mxu0
      %v1282 = vadd.f32 0.0, %v1281
      %1283 = vmatmul.f32.gmra.mxu0 %v1193
      %v1284 = vpop.f32.mrf.mxu0
      %v1285 = vadd.f32 0.0, %v1284
      %1286 = vmatmul.f32.gmra.mxu0 %v1196
      %v1287 = vpop.f32.mrf.mxu0
      %v1288 = vadd.f32 0.0, %v1287
      %1289 = vmatmul.f32.gmra.mxu0 %v1199
      %v1290 = vpop.f32.mrf.mxu0
      %v1291 = vadd.f32 0.0, %v1290
      %1292 = vmatmul.f32.gmra.mxu0 %v1202
      %v1293 = vpop.f32.mrf.mxu0
      %v1294 = vadd.f32 0.0, %v1293
      %1295 = vmatmul.f32.gmra.mxu0 %v1205
      %v1296 = vpop.f32.mrf.mxu0
      %v1297 = vadd.f32 0.0, %v1296
      %1298 = vmatmul.f32.gmra.mxu0 %v1208
      %v1299 = vpop.f32.mrf.mxu0
      %v1300 = vadd.f32 0.0, %v1299
      %1301 = vmatmul.f32.gmra.mxu0 %v1211
      %v1302 = vpop.f32.mrf.mxu0
      %v1303 = vadd.f32 0.0, %v1302
      %1304 = vmatmul.f32.gmra.mxu0 %v1214
      %v1305 = vpop.f32.mrf.mxu0
      %v1306 = vadd.f32 0.0, %v1305
      %1307 = vmatmul.f32.gmra.mxu0 %v1217
      %v1308 = vpop.f32.mrf.mxu0
      %v1309 = vadd.f32 0.0, %v1308
      %1310 = vmatmul.f32.gmra.mxu0 %v1220
      %v1311 = vpop.f32.mrf.mxu0
      %v1312 = vadd.f32 0.0, %v1311
      %1313 = vdwg.mxu0
      %1314 = vst.msk [vmem:[#allocation3] sm:$0xff] %vm288, %v1243
      %1315 = vst.msk [vmem:[#allocation3 + $0x8] sm:$0xff] %vm288, %v1246
      %1316 = vst.msk [vmem:[#allocation3 + $0x10] sm:$0xff] %vm288, %v1249
      %1317 = vst.msk [vmem:[#allocation3 + $0x18] sm:$0xff] %vm288, %v1252
      %1318 = vst.msk [vmem:[#allocation3 + $0x20] sm:$0xff] %vm288, %v1255
      %1319 = vst.msk [vmem:[#allocation3 + $0x28] sm:$0xff] %vm288, %v1258
      %1320 = vst.msk [vmem:[#allocation3 + $0x30] sm:$0xff] %vm288, %v1261
      %1321 = vst.msk [vmem:[#allocation3 + $0x38] sm:$0xff] %vm288, %v1264
      %1322 = vst.msk [vmem:[#allocation3 + $0x40] sm:$0xff] %vm288, %v1267
      %1323 = vst.msk [vmem:[#allocation3 + $0x48] sm:$0xff] %vm288, %v1270
      %1324 = vst.msk [vmem:[#allocation3 + $0x50] sm:$0xff] %vm288, %v1273
      %1325 = vst.msk [vmem:[#allocation3 + $0x58] sm:$0xff] %vm288, %v1276
      %1326 = vst.msk [vmem:[#allocation3 + $0x60] sm:$0xff] %vm288, %v1279
      %1327 = vst.msk [vmem:[#allocation3 + $0x68] sm:$0xff] %vm288, %v1282
      %1328 = vst.msk [vmem:[#allocation3 + $0x70] sm:$0xff] %vm288, %v1285
      %1329 = vst.msk [vmem:[#allocation3 + $0x78] sm:$0xff] %vm288, %v1288
      %1330 = vst.msk [vmem:[#allocation3 + $0x80] sm:$0xff] %vm288, %v1291
      %1331 = vst.msk [vmem:[#allocation3 + $0x88] sm:$0xff] %vm288, %v1294
      %1332 = vst.msk [vmem:[#allocation3 + $0x90] sm:$0xff] %vm288, %v1297
      %1333 = vst.msk [vmem:[#allocation3 + $0x98] sm:$0xff] %vm288, %v1300
      %1334 = vst.msk [vmem:[#allocation3 + $0xa0] sm:$0xff] %vm288, %v1303
      %1335 = vst.msk [vmem:[#allocation3 + $0xa8] sm:$0xff] %vm288, %v1306
      %1336 = vst.msk [vmem:[#allocation3 + $0xb0] sm:$0xff] %vm288, %v1309
      %1337 = vst.msk [vmem:[#allocation3 + $0xb8] sm:$0xff] %vm288, %v1312
      %s1338 = scalar_lea.vmem [#allocation2], 24
      %v1339 = vld [vmem:[%s1338] sm:$0xff]
      %v1340 = vld [vmem:[%s1338 + $0x8] sm:$0xff]
      %v1341 = vld [vmem:[%s1338 + $0x10] sm:$0xff]
      %v1342 = vld [vmem:[%s1338 + $0x18] sm:$0xff]
      %v1343 = vld [vmem:[%s1338 + $0x20] sm:$0xff]
      %v1344 = vld [vmem:[%s1338 + $0x28] sm:$0xff]
      %v1345 = vld [vmem:[%s1338 + $0x30] sm:$0xff]
      %v1346 = vld [vmem:[%s1338 + $0x38] sm:$0xff]
      %v1347 = vld [vmem:[%s1338 + $0x40] sm:$0xff]
      %v1348 = vld [vmem:[%s1338 + $0x48] sm:$0xff]
      %v1349 = vld [vmem:[%s1338 + $0x50] sm:$0xff]
      %v1350 = vld [vmem:[%s1338 + $0x58] sm:$0xff]
      %v1351 = vld [vmem:[%s1338 + $0x60] sm:$0xff]
      %v1352 = vld [vmem:[%s1338 + $0x68] sm:$0xff]
      %v1353 = vld [vmem:[%s1338 + $0x70] sm:$0xff]
      %v1354 = vld [vmem:[%s1338 + $0x78] sm:$0xff]
      %v1355 = vld [vmem:[%s1338 + $0x80] sm:$0xff]
      %v1356 = vld [vmem:[%s1338 + $0x88] sm:$0xff]
      %v1357 = vld [vmem:[%s1338 + $0x90] sm:$0xff]
      %v1358 = vld [vmem:[%s1338 + $0x98] sm:$0xff]
      %v1359 = vld [vmem:[%s1338 + $0xa0] sm:$0xff]
      %v1360 = vld [vmem:[%s1338 + $0xa8] sm:$0xff]
      %v1361 = vld [vmem:[%s1338 + $0xb0] sm:$0xff]
      %v1362 = vld [vmem:[%s1338 + $0xb8] sm:$0xff]
      %s1363 = scalar_lea.vmem %s3, 16
      %v1364 = vld [vmem:[%s1363] sm:$0xff]
      %v1365 = vld [vmem:[%s1363 + $0x8] sm:$0xf]
      %v1367 = vsel %vm1093, %v1339, 0
      %v1370 = vsel %vm1093, %v1340, 0
      %v1373 = vsel %vm1093, %v1341, 0
      %v1376 = vsel %vm1093, %v1342, 0
      %v1379 = vsel %vm1093, %v1343, 0
      %v1382 = vsel %vm1093, %v1344, 0
      %v1385 = vsel %vm1093, %v1345, 0
      %v1388 = vsel %vm1093, %v1346, 0
      %v1391 = vsel %vm1093, %v1347, 0
      %v1394 = vsel %vm1093, %v1348, 0
      %v1397 = vsel %vm1093, %v1349, 0
      %v1400 = vsel %vm1093, %v1350, 0
      %v1403 = vsel %vm1093, %v1351, 0
      %v1406 = vsel %vm1093, %v1352, 0
      %v1409 = vsel %vm1093, %v1353, 0
      %v1412 = vsel %vm1093, %v1354, 0
      %v1415 = vsel %vm1093, %v1355, 0
      %v1418 = vsel %vm1093, %v1356, 0
      %v1421 = vsel %vm1093, %v1357, 0
      %v1424 = vsel %vm1093, %v1358, 0
      %v1427 = vsel %vm1093, %v1359, 0
      %v1430 = vsel %vm1093, %v1360, 0
      %v1433 = vsel %vm1093, %v1361, 0
      %v1436 = vsel %vm1093, %v1362, 0
      %v1439 = vsel %vm379, %v1365, 0
      %1441 = vmatpush.msra.mxu0 0.0
      %1442 = vmatpush.msra.mxu0 0.0
      %1443 = vmatpush.msra.mxu0 0.0
      %1444 = vmatpush.msra.mxu0 0.0
      %1445 = vmatpush.msra.mxu0 0.0
      %1446 = vmatpush.msra.mxu0 0.0
      %1447 = vmatpush.msra.mxu0 0.0
      %1448 = vmatpush.msra.mxu0 0.0
      %1449 = vmatpush.msra.mxu0 0.0
      %1450 = vmatpush.msra.mxu0 0.0
      %1451 = vmatpush.msra.mxu0 0.0
      %1452 = vmatpush.msra.mxu0 0.0
      %1453 = vmatpush.msra.mxu0 0.0
      %1454 = vmatpush.msra.mxu0 0.0
      %1455 = vmatpush.msra.mxu0 %v1439
      %1456 = vmatpush.msra.mxu0 %v1364
      %1457 = vmatmul.f32.gmra.mxu0 %v1367
      %v1458 = vpop.f32.mrf.mxu0
      %v1459 = vadd.f32 0.0, %v1458
      %1460 = vmatmul.f32.gmra.mxu0 %v1370
      %v1461 = vpop.f32.mrf.mxu0
      %v1462 = vadd.f32 0.0, %v1461
      %1463 = vmatmul.f32.gmra.mxu0 %v1373
      %v1464 = vpop.f32.mrf.mxu0
      %v1465 = vadd.f32 0.0, %v1464
      %1466 = vmatmul.f32.gmra.mxu0 %v1376
      %v1467 = vpop.f32.mrf.mxu0
      %v1468 = vadd.f32 0.0, %v1467
      %1469 = vmatmul.f32.gmra.mxu0 %v1379
      %v1470 = vpop.f32.mrf.mxu0
      %v1471 = vadd.f32 0.0, %v1470
      %1472 = vmatmul.f32.gmra.mxu0 %v1382
      %v1473 = vpop.f32.mrf.mxu0
      %v1474 = vadd.f32 0.0, %v1473
      %1475 = vmatmul.f32.gmra.mxu0 %v1385
      %v1476 = vpop.f32.mrf.mxu0
      %v1477 = vadd.f32 0.0, %v1476
      %1478 = vmatmul.f32.gmra.mxu0 %v1388
      %v1479 = vpop.f32.mrf.mxu0
      %v1480 = vadd.f32 0.0, %v1479
      %1481 = vmatmul.f32.gmra.mxu0 %v1391
      %v1482 = vpop.f32.mrf.mxu0
      %v1483 = vadd.f32 0.0, %v1482
      %1484 = vmatmul.f32.gmra.mxu0 %v1394
      %v1485 = vpop.f32.mrf.mxu0
      %v1486 = vadd.f32 0.0, %v1485
      %1487 = vmatmul.f32.gmra.mxu0 %v1397
      %v1488 = vpop.f32.mrf.mxu0
      %v1489 = vadd.f32 0.0, %v1488
      %1490 = vmatmul.f32.gmra.mxu0 %v1400
      %v1491 = vpop.f32.mrf.mxu0
      %v1492 = vadd.f32 0.0, %v1491
      %1493 = vmatmul.f32.gmra.mxu0 %v1403
      %v1494 = vpop.f32.mrf.mxu0
      %v1495 = vadd.f32 0.0, %v1494
      %1496 = vmatmul.f32.gmra.mxu0 %v1406
      %v1497 = vpop.f32.mrf.mxu0
      %v1498 = vadd.f32 0.0, %v1497
      %1499 = vmatmul.f32.gmra.mxu0 %v1409
      %v1500 = vpop.f32.mrf.mxu0
      %v1501 = vadd.f32 0.0, %v1500
      %1502 = vmatmul.f32.gmra.mxu0 %v1412
      %v1503 = vpop.f32.mrf.mxu0
      %v1504 = vadd.f32 0.0, %v1503
      %1505 = vmatmul.f32.gmra.mxu0 %v1415
      %v1506 = vpop.f32.mrf.mxu0
      %v1507 = vadd.f32 0.0, %v1506
      %1508 = vmatmul.f32.gmra.mxu0 %v1418
      %v1509 = vpop.f32.mrf.mxu0
      %v1510 = vadd.f32 0.0, %v1509
      %1511 = vmatmul.f32.gmra.mxu0 %v1421
      %v1512 = vpop.f32.mrf.mxu0
      %v1513 = vadd.f32 0.0, %v1512
      %1514 = vmatmul.f32.gmra.mxu0 %v1424
      %v1515 = vpop.f32.mrf.mxu0
      %v1516 = vadd.f32 0.0, %v1515
      %1517 = vmatmul.f32.gmra.mxu0 %v1427
      %v1518 = vpop.f32.mrf.mxu0
      %v1519 = vadd.f32 0.0, %v1518
      %1520 = vmatmul.f32.gmra.mxu0 %v1430
      %v1521 = vpop.f32.mrf.mxu0
      %v1522 = vadd.f32 0.0, %v1521
      %1523 = vmatmul.f32.gmra.mxu0 %v1433
      %v1524 = vpop.f32.mrf.mxu0
      %v1525 = vadd.f32 0.0, %v1524
      %1526 = vmatmul.f32.gmra.mxu0 %v1436
      %v1527 = vpop.f32.mrf.mxu0
      %v1528 = vadd.f32 0.0, %v1527
      %1529 = vdwg.mxu0
      %v1530 = vld [vmem:[#allocation3] sm:$0xff]
      %v1531 = vld [vmem:[#allocation3 + $0x8] sm:$0xff]
      %v1532 = vld [vmem:[#allocation3 + $0x10] sm:$0xff]
      %v1533 = vld [vmem:[#allocation3 + $0x18] sm:$0xff]
      %v1534 = vld [vmem:[#allocation3 + $0x20] sm:$0xff]
      %v1535 = vld [vmem:[#allocation3 + $0x28] sm:$0xff]
      %v1536 = vld [vmem:[#allocation3 + $0x30] sm:$0xff]
      %v1537 = vld [vmem:[#allocation3 + $0x38] sm:$0xff]
      %v1538 = vld [vmem:[#allocation3 + $0x40] sm:$0xff]
      %v1539 = vld [vmem:[#allocation3 + $0x48] sm:$0xff]
      %v1540 = vld [vmem:[#allocation3 + $0x50] sm:$0xff]
      %v1541 = vld [vmem:[#allocation3 + $0x58] sm:$0xff]
      %v1542 = vld [vmem:[#allocation3 + $0x60] sm:$0xff]
      %v1543 = vld [vmem:[#allocation3 + $0x68] sm:$0xff]
      %v1544 = vld [vmem:[#allocation3 + $0x70] sm:$0xff]
      %v1545 = vld [vmem:[#allocation3 + $0x78] sm:$0xff]
      %v1546 = vld [vmem:[#allocation3 + $0x80] sm:$0xff]
      %v1547 = vld [vmem:[#allocation3 + $0x88] sm:$0xff]
      %v1548 = vld [vmem:[#allocation3 + $0x90] sm:$0xff]
      %v1549 = vld [vmem:[#allocation3 + $0x98] sm:$0xff]
      %v1550 = vld [vmem:[#allocation3 + $0xa0] sm:$0xff]
      %v1551 = vld [vmem:[#allocation3 + $0xa8] sm:$0xff]
      %v1552 = vld [vmem:[#allocation3 + $0xb0] sm:$0xff]
      %v1553 = vld [vmem:[#allocation3 + $0xb8] sm:$0xff]
      %v1554 = vadd.f32 %v1530, %v1459
      %v1555 = vadd.f32 %v1531, %v1462
      %v1556 = vadd.f32 %v1532, %v1465
      %v1557 = vadd.f32 %v1533, %v1468
      %v1558 = vadd.f32 %v1534, %v1471
      %v1559 = vadd.f32 %v1535, %v1474
      %v1560 = vadd.f32 %v1536, %v1477
      %v1561 = vadd.f32 %v1537, %v1480
      %v1562 = vadd.f32 %v1538, %v1483
      %v1563 = vadd.f32 %v1539, %v1486
      %v1564 = vadd.f32 %v1540, %v1489
      %v1565 = vadd.f32 %v1541, %v1492
      %v1566 = vadd.f32 %v1542, %v1495
      %v1567 = vadd.f32 %v1543, %v1498
      %v1568 = vadd.f32 %v1544, %v1501
      %v1569 = vadd.f32 %v1545, %v1504
      %v1570 = vadd.f32 %v1546, %v1507
      %v1571 = vadd.f32 %v1547, %v1510
      %v1572 = vadd.f32 %v1548, %v1513
      %v1573 = vadd.f32 %v1549, %v1516
      %v1574 = vadd.f32 %v1550, %v1519
      %v1575 = vadd.f32 %v1551, %v1522
      %v1576 = vadd.f32 %v1552, %v1525
      %v1577 = vadd.f32 %v1553, %v1528
      %1578 = vst.msk [vmem:[#allocation3] sm:$0xff] %vm288, %v1554
      %1579 = vst.msk [vmem:[#allocation3 + $0x8] sm:$0xff] %vm288, %v1555
      %1580 = vst.msk [vmem:[#allocation3 + $0x10] sm:$0xff] %vm288, %v1556
      %1581 = vst.msk [vmem:[#allocation3 + $0x18] sm:$0xff] %vm288, %v1557
      %1582 = vst.msk [vmem:[#allocation3 + $0x20] sm:$0xff] %vm288, %v1558
      %1583 = vst.msk [vmem:[#allocation3 + $0x28] sm:$0xff] %vm288, %v1559
      %1584 = vst.msk [vmem:[#allocation3 + $0x30] sm:$0xff] %vm288, %v1560
      %1585 = vst.msk [vmem:[#allocation3 + $0x38] sm:$0xff] %vm288, %v1561
      %1586 = vst.msk [vmem:[#allocation3 + $0x40] sm:$0xff] %vm288, %v1562
      %1587 = vst.msk [vmem:[#allocation3 + $0x48] sm:$0xff] %vm288, %v1563
      %1588 = vst.msk [vmem:[#allocation3 + $0x50] sm:$0xff] %vm288, %v1564
      %1589 = vst.msk [vmem:[#allocation3 + $0x58] sm:$0xff] %vm288, %v1565
      %1590 = vst.msk [vmem:[#allocation3 + $0x60] sm:$0xff] %vm288, %v1566
      %1591 = vst.msk [vmem:[#allocation3 + $0x68] sm:$0xff] %vm288, %v1567
      %1592 = vst.msk [vmem:[#allocation3 + $0x70] sm:$0xff] %vm288, %v1568
      %1593 = vst.msk [vmem:[#allocation3 + $0x78] sm:$0xff] %vm288, %v1569
      %1594 = vst.msk [vmem:[#allocation3 + $0x80] sm:$0xff] %vm288, %v1570
      %1595 = vst.msk [vmem:[#allocation3 + $0x88] sm:$0xff] %vm288, %v1571
      %1596 = vst.msk [vmem:[#allocation3 + $0x90] sm:$0xff] %vm288, %v1572
      %1597 = vst.msk [vmem:[#allocation3 + $0x98] sm:$0xff] %vm288, %v1573
      %1598 = vst.msk [vmem:[#allocation3 + $0xa0] sm:$0xff] %vm288, %v1574
      %1599 = vst.msk [vmem:[#allocation3 + $0xa8] sm:$0xff] %vm288, %v1575
      %1600 = vst.msk [vmem:[#allocation3 + $0xb0] sm:$0xff] %vm288, %v1576
      %1601 = vst.msk [vmem:[#allocation3 + $0xb8] sm:$0xff] %vm288, %v1577
      %s1602 = scalar_lea.vmem [#allocation2], 48
      %v1603 = vld [vmem:[%s1602] sm:$0xff]
      %v1604 = vld [vmem:[%s1602 + $0x8] sm:$0xff]
      %v1605 = vld [vmem:[%s1602 + $0x10] sm:$0xff]
      %v1606 = vld [vmem:[%s1602 + $0x18] sm:$0xff]
      %v1607 = vld [vmem:[%s1602 + $0x20] sm:$0xff]
      %v1608 = vld [vmem:[%s1602 + $0x28] sm:$0xff]
      %v1609 = vld [vmem:[%s1602 + $0x30] sm:$0xff]
      %v1610 = vld [vmem:[%s1602 + $0x38] sm:$0xff]
      %v1611 = vld [vmem:[%s1602 + $0x40] sm:$0xff]
      %v1612 = vld [vmem:[%s1602 + $0x48] sm:$0xff]
      %v1613 = vld [vmem:[%s1602 + $0x50] sm:$0xff]
      %v1614 = vld [vmem:[%s1602 + $0x58] sm:$0xff]
      %v1615 = vld [vmem:[%s1602 + $0x60] sm:$0xff]
      %v1616 = vld [vmem:[%s1602 + $0x68] sm:$0xff]
      %v1617 = vld [vmem:[%s1602 + $0x70] sm:$0xff]
      %v1618 = vld [vmem:[%s1602 + $0x78] sm:$0xff]
      %v1619 = vld [vmem:[%s1602 + $0x80] sm:$0xff]
      %v1620 = vld [vmem:[%s1602 + $0x88] sm:$0xff]
      %v1621 = vld [vmem:[%s1602 + $0x90] sm:$0xff]
      %v1622 = vld [vmem:[%s1602 + $0x98] sm:$0xff]
      %v1623 = vld [vmem:[%s1602 + $0xa0] sm:$0xff]
      %v1624 = vld [vmem:[%s1602 + $0xa8] sm:$0xff]
      %v1625 = vld [vmem:[%s1602 + $0xb0] sm:$0xff]
      %v1626 = vld [vmem:[%s1602 + $0xb8] sm:$0xff]
      %s1627 = scalar_lea.vmem %s3, 32
      %v1628 = vld [vmem:[%s1627] sm:$0xff]
      %v1629 = vld [vmem:[%s1627 + $0x8] sm:$0xf]
      %v1631 = vsel %vm1093, %v1603, 0
      %v1634 = vsel %vm1093, %v1604, 0
      %v1637 = vsel %vm1093, %v1605, 0
      %v1640 = vsel %vm1093, %v1606, 0
      %v1643 = vsel %vm1093, %v1607, 0
      %v1646 = vsel %vm1093, %v1608, 0
      %v1649 = vsel %vm1093, %v1609, 0
      %v1652 = vsel %vm1093, %v1610, 0
      %v1655 = vsel %vm1093, %v1611, 0
      %v1658 = vsel %vm1093, %v1612, 0
      %v1661 = vsel %vm1093, %v1613, 0
      %v1664 = vsel %vm1093, %v1614, 0
      %v1667 = vsel %vm1093, %v1615, 0
      %v1670 = vsel %vm1093, %v1616, 0
      %v1673 = vsel %vm1093, %v1617, 0
      %v1676 = vsel %vm1093, %v1618, 0
      %v1679 = vsel %vm1093, %v1619, 0
      %v1682 = vsel %vm1093, %v1620, 0
      %v1685 = vsel %vm1093, %v1621, 0
      %v1688 = vsel %vm1093, %v1622, 0
      %v1691 = vsel %vm1093, %v1623, 0
      %v1694 = vsel %vm1093, %v1624, 0
      %v1697 = vsel %vm1093, %v1625, 0
      %v1700 = vsel %vm1093, %v1626, 0
      %v1703 = vsel %vm379, %v1629, 0
      %1705 = vmatpush.msra.mxu0 0.0
      %1706 = vmatpush.msra.mxu0 0.0
      %1707 = vmatpush.msra.mxu0 0.0
      %1708 = vmatpush.msra.mxu0 0.0
      %1709 = vmatpush.msra.mxu0 0.0
      %1710 = vmatpush.msra.mxu0 0.0
      %1711 = vmatpush.msra.mxu0 0.0
      %1712 = vmatpush.msra.mxu0 0.0
      %1713 = vmatpush.msra.mxu0 0.0
      %1714 = vmatpush.msra.mxu0 0.0
      %1715 = vmatpush.msra.mxu0 0.0
      %1716 = vmatpush.msra.mxu0 0.0
      %1717 = vmatpush.msra.mxu0 0.0
      %1718 = vmatpush.msra.mxu0 0.0
      %1719 = vmatpush.msra.mxu0 %v1703
      %1720 = vmatpush.msra.mxu0 %v1628
      %1721 = vmatmul.f32.gmra.mxu0 %v1631
      %v1722 = vpop.f32.mrf.mxu0
      %v1723 = vadd.f32 0.0, %v1722
      %1724 = vmatmul.f32.gmra.mxu0 %v1634
      %v1725 = vpop.f32.mrf.mxu0
      %v1726 = vadd.f32 0.0, %v1725
      %1727 = vmatmul.f32.gmra.mxu0 %v1637
      %v1728 = vpop.f32.mrf.mxu0
      %v1729 = vadd.f32 0.0, %v1728
      %1730 = vmatmul.f32.gmra.mxu0 %v1640
      %v1731 = vpop.f32.mrf.mxu0
      %v1732 = vadd.f32 0.0, %v1731
      %1733 = vmatmul.f32.gmra.mxu0 %v1643
      %v1734 = vpop.f32.mrf.mxu0
      %v1735 = vadd.f32 0.0, %v1734
      %1736 = vmatmul.f32.gmra.mxu0 %v1646
      %v1737 = vpop.f32.mrf.mxu0
      %v1738 = vadd.f32 0.0, %v1737
      %1739 = vmatmul.f32.gmra.mxu0 %v1649
      %v1740 = vpop.f32.mrf.mxu0
      %v1741 = vadd.f32 0.0, %v1740
      %1742 = vmatmul.f32.gmra.mxu0 %v1652
      %v1743 = vpop.f32.mrf.mxu0
      %v1744 = vadd.f32 0.0, %v1743
      %1745 = vmatmul.f32.gmra.mxu0 %v1655
      %v1746 = vpop.f32.mrf.mxu0
      %v1747 = vadd.f32 0.0, %v1746
      %1748 = vmatmul.f32.gmra.mxu0 %v1658
      %v1749 = vpop.f32.mrf.mxu0
      %v1750 = vadd.f32 0.0, %v1749
      %1751 = vmatmul.f32.gmra.mxu0 %v1661
      %v1752 = vpop.f32.mrf.mxu0
      %v1753 = vadd.f32 0.0, %v1752
      %1754 = vmatmul.f32.gmra.mxu0 %v1664
      %v1755 = vpop.f32.mrf.mxu0
      %v1756 = vadd.f32 0.0, %v1755
      %1757 = vmatmul.f32.gmra.mxu0 %v1667
      %v1758 = vpop.f32.mrf.mxu0
      %v1759 = vadd.f32 0.0, %v1758
      %1760 = vmatmul.f32.gmra.mxu0 %v1670
      %v1761 = vpop.f32.mrf.mxu0
      %v1762 = vadd.f32 0.0, %v1761
      %1763 = vmatmul.f32.gmra.mxu0 %v1673
      %v1764 = vpop.f32.mrf.mxu0
      %v1765 = vadd.f32 0.0, %v1764
      %1766 = vmatmul.f32.gmra.mxu0 %v1676
      %v1767 = vpop.f32.mrf.mxu0
      %v1768 = vadd.f32 0.0, %v1767
      %1769 = vmatmul.f32.gmra.mxu0 %v1679
      %v1770 = vpop.f32.mrf.mxu0
      %v1771 = vadd.f32 0.0, %v1770
      %1772 = vmatmul.f32.gmra.mxu0 %v1682
      %v1773 = vpop.f32.mrf.mxu0
      %v1774 = vadd.f32 0.0, %v1773
      %1775 = vmatmul.f32.gmra.mxu0 %v1685
      %v1776 = vpop.f32.mrf.mxu0
      %v1777 = vadd.f32 0.0, %v1776
      %1778 = vmatmul.f32.gmra.mxu0 %v1688
      %v1779 = vpop.f32.mrf.mxu0
      %v1780 = vadd.f32 0.0, %v1779
      %1781 = vmatmul.f32.gmra.mxu0 %v1691
      %v1782 = vpop.f32.mrf.mxu0
      %v1783 = vadd.f32 0.0, %v1782
      %1784 = vmatmul.f32.gmra.mxu0 %v1694
      %v1785 = vpop.f32.mrf.mxu0
      %v1786 = vadd.f32 0.0, %v1785
      %1787 = vmatmul.f32.gmra.mxu0 %v1697
      %v1788 = vpop.f32.mrf.mxu0
      %v1789 = vadd.f32 0.0, %v1788
      %1790 = vmatmul.f32.gmra.mxu0 %v1700
      %v1791 = vpop.f32.mrf.mxu0
      %v1792 = vadd.f32 0.0, %v1791
      %1793 = vdwg.mxu0
      %v1794 = vld [vmem:[#allocation3] sm:$0xff]
      %v1795 = vld [vmem:[#allocation3 + $0x8] sm:$0xff]
      %v1796 = vld [vmem:[#allocation3 + $0x10] sm:$0xff]
      %v1797 = vld [vmem:[#allocation3 + $0x18] sm:$0xff]
      %v1798 = vld [vmem:[#allocation3 + $0x20] sm:$0xff]
      %v1799 = vld [vmem:[#allocation3 + $0x28] sm:$0xff]
      %v1800 = vld [vmem:[#allocation3 + $0x30] sm:$0xff]
      %v1801 = vld [vmem:[#allocation3 + $0x38] sm:$0xff]
      %v1802 = vld [vmem:[#allocation3 + $0x40] sm:$0xff]
      %v1803 = vld [vmem:[#allocation3 + $0x48] sm:$0xff]
      %v1804 = vld [vmem:[#allocation3 + $0x50] sm:$0xff]
      %v1805 = vld [vmem:[#allocation3 + $0x58] sm:$0xff]
      %v1806 = vld [vmem:[#allocation3 + $0x60] sm:$0xff]
      %v1807 = vld [vmem:[#allocation3 + $0x68] sm:$0xff]
      %v1808 = vld [vmem:[#allocation3 + $0x70] sm:$0xff]
      %v1809 = vld [vmem:[#allocation3 + $0x78] sm:$0xff]
      %v1810 = vld [vmem:[#allocation3 + $0x80] sm:$0xff]
      %v1811 = vld [vmem:[#allocation3 + $0x88] sm:$0xff]
      %v1812 = vld [vmem:[#allocation3 + $0x90] sm:$0xff]
      %v1813 = vld [vmem:[#allocation3 + $0x98] sm:$0xff]
      %v1814 = vld [vmem:[#allocation3 + $0xa0] sm:$0xff]
      %v1815 = vld [vmem:[#allocation3 + $0xa8] sm:$0xff]
      %v1816 = vld [vmem:[#allocation3 + $0xb0] sm:$0xff]
      %v1817 = vld [vmem:[#allocation3 + $0xb8] sm:$0xff]
      %v1818 = vadd.f32 %v1794, %v1723
      %v1819 = vadd.f32 %v1795, %v1726
      %v1820 = vadd.f32 %v1796, %v1729
      %v1821 = vadd.f32 %v1797, %v1732
      %v1822 = vadd.f32 %v1798, %v1735
      %v1823 = vadd.f32 %v1799, %v1738
      %v1824 = vadd.f32 %v1800, %v1741
      %v1825 = vadd.f32 %v1801, %v1744
      %v1826 = vadd.f32 %v1802, %v1747
      %v1827 = vadd.f32 %v1803, %v1750
      %v1828 = vadd.f32 %v1804, %v1753
      %v1829 = vadd.f32 %v1805, %v1756
      %v1830 = vadd.f32 %v1806, %v1759
      %v1831 = vadd.f32 %v1807, %v1762
      %v1832 = vadd.f32 %v1808, %v1765
      %v1833 = vadd.f32 %v1809, %v1768
      %v1834 = vadd.f32 %v1810, %v1771
      %v1835 = vadd.f32 %v1811, %v1774
      %v1836 = vadd.f32 %v1812, %v1777
      %v1837 = vadd.f32 %v1813, %v1780
      %v1838 = vadd.f32 %v1814, %v1783
      %v1839 = vadd.f32 %v1815, %v1786
      %v1840 = vadd.f32 %v1816, %v1789
      %v1841 = vadd.f32 %v1817, %v1792
      %1842 = vst.msk [vmem:[#allocation3] sm:$0xff] %vm288, %v1818
      %1843 = vst.msk [vmem:[#allocation3 + $0x8] sm:$0xff] %vm288, %v1819
      %1844 = vst.msk [vmem:[#allocation3 + $0x10] sm:$0xff] %vm288, %v1820
      %1845 = vst.msk [vmem:[#allocation3 + $0x18] sm:$0xff] %vm288, %v1821
      %1846 = vst.msk [vmem:[#allocation3 + $0x20] sm:$0xff] %vm288, %v1822
      %1847 = vst.msk [vmem:[#allocation3 + $0x28] sm:$0xff] %vm288, %v1823
      %1848 = vst.msk [vmem:[#allocation3 + $0x30] sm:$0xff] %vm288, %v1824
      %1849 = vst.msk [vmem:[#allocation3 + $0x38] sm:$0xff] %vm288, %v1825
      %1850 = vst.msk [vmem:[#allocation3 + $0x40] sm:$0xff] %vm288, %v1826
      %1851 = vst.msk [vmem:[#allocation3 + $0x48] sm:$0xff] %vm288, %v1827
      %1852 = vst.msk [vmem:[#allocation3 + $0x50] sm:$0xff] %vm288, %v1828
      %1853 = vst.msk [vmem:[#allocation3 + $0x58] sm:$0xff] %vm288, %v1829
      %1854 = vst.msk [vmem:[#allocation3 + $0x60] sm:$0xff] %vm288, %v1830
      %1855 = vst.msk [vmem:[#allocation3 + $0x68] sm:$0xff] %vm288, %v1831
      %1856 = vst.msk [vmem:[#allocation3 + $0x70] sm:$0xff] %vm288, %v1832
      %1857 = vst.msk [vmem:[#allocation3 + $0x78] sm:$0xff] %vm288, %v1833
      %1858 = vst.msk [vmem:[#allocation3 + $0x80] sm:$0xff] %vm288, %v1834
      %1859 = vst.msk [vmem:[#allocation3 + $0x88] sm:$0xff] %vm288, %v1835
      %1860 = vst.msk [vmem:[#allocation3 + $0x90] sm:$0xff] %vm288, %v1836
      %1861 = vst.msk [vmem:[#allocation3 + $0x98] sm:$0xff] %vm288, %v1837
      %1862 = vst.msk [vmem:[#allocation3 + $0xa0] sm:$0xff] %vm288, %v1838
      %1863 = vst.msk [vmem:[#allocation3 + $0xa8] sm:$0xff] %vm288, %v1839
      %1864 = vst.msk [vmem:[#allocation3 + $0xb0] sm:$0xff] %vm288, %v1840
      %1865 = vst.msk [vmem:[#allocation3 + $0xb8] sm:$0xff] %vm288, %v1841
      %v1866 = vld [vmem:[#allocation3] sm:$0xff]
      %v1867 = vld [vmem:[#allocation3 + $0x8] sm:$0xff]
      %v1868 = vld [vmem:[#allocation3 + $0x18] sm:$0xff]
      %v1869 = vld [vmem:[#allocation3 + $0x20] sm:$0xff]
      %v1870 = vld [vmem:[#allocation3 + $0x30] sm:$0xff]
      %v1871 = vld [vmem:[#allocation3 + $0x38] sm:$0xff]
      %v1872 = vld [vmem:[#allocation3 + $0x48] sm:$0xff]
      %v1873 = vld [vmem:[#allocation3 + $0x50] sm:$0xff]
      %v1874 = vld [vmem:[#allocation3 + $0x60] sm:$0xff]
      %v1875 = vld [vmem:[#allocation3 + $0x68] sm:$0xff]
      %v1876 = vld [vmem:[#allocation3 + $0x78] sm:$0xff]
      %v1877 = vld [vmem:[#allocation3 + $0x80] sm:$0xff]
      %v1878 = vld [vmem:[#allocation3 + $0x90] sm:$0xff]
      %v1879 = vld [vmem:[#allocation3 + $0x98] sm:$0xff]
      %v1880 = vld [vmem:[#allocation3 + $0xa8] sm:$0xff]
      %v1881 = vld [vmem:[#allocation3 + $0xb0] sm:$0xff]
      %v1882 = vld [vmem:[%s4] sm:$0x1]
      %v1884 = vperm.slane %v1882, 0
      %v1886 = vadd.f32 %v1866, %v1884
      %v1887 = vadd.f32 %v1867, %v1884
      %v1888 = vadd.f32 %v1868, %v1884
      %v1889 = vadd.f32 %v1869, %v1884
      %v1890 = vadd.f32 %v1870, %v1884
      %v1891 = vadd.f32 %v1871, %v1884
      %v1892 = vadd.f32 %v1872, %v1884
      %v1893 = vadd.f32 %v1873, %v1884
      %v1894 = vadd.f32 %v1874, %v1884
      %v1895 = vadd.f32 %v1875, %v1884
      %v1896 = vadd.f32 %v1876, %v1884
      %v1897 = vadd.f32 %v1877, %v1884
      %v1898 = vadd.f32 %v1878, %v1884
      %v1899 = vadd.f32 %v1879, %v1884
      %v1900 = vadd.f32 %v1880, %v1884
      %v1901 = vadd.f32 %v1881, %v1884
      %v1902 = vmax.f32 %v1886, 0.0
      %v1903 = vmax.f32 %v1887, 0.0
      %v1904 = vmax.f32 %v1888, 0.0
      %v1905 = vmax.f32 %v1889, 0.0
      %v1906 = vmax.f32 %v1890, 0.0
      %v1907 = vmax.f32 %v1891, 0.0
      %v1908 = vmax.f32 %v1892, 0.0
      %v1909 = vmax.f32 %v1893, 0.0
      %v1910 = vmax.f32 %v1894, 0.0
      %v1911 = vmax.f32 %v1895, 0.0
      %v1912 = vmax.f32 %v1896, 0.0
      %v1913 = vmax.f32 %v1897, 0.0
      %v1914 = vmax.f32 %v1898, 0.0
      %v1915 = vmax.f32 %v1899, 0.0
      %v1916 = vmax.f32 %v1900, 0.0
      %v1917 = vmax.f32 %v1901, 0.0
      %1918 = vst.msk [vmem:[%s248] sm:$0xff] %vm288, %v1902
      %1919 = vst.msk [vmem:[%s248 + $0x8] sm:$0xff] %vm288, %v1903
      %1920 = vst.msk [vmem:[%s248 + $0x10] sm:$0xff] %vm288, %v1904
      %1921 = vst.msk [vmem:[%s248 + $0x18] sm:$0xff] %vm288, %v1905
      %1922 = vst.msk [vmem:[%s248 + $0x20] sm:$0xff] %vm288, %v1906
      %1923 = vst.msk [vmem:[%s248 + $0x28] sm:$0xff] %vm288, %v1907
      %1924 = vst.msk [vmem:[%s248 + $0x30] sm:$0xff] %vm288, %v1908
      %1925 = vst.msk [vmem:[%s248 + $0x38] sm:$0xff] %vm288, %v1909
      %1926 = vst.msk [vmem:[%s248 + $0x40] sm:$0xff] %vm288, %v1910
      %1927 = vst.msk [vmem:[%s248 + $0x48] sm:$0xff] %vm288, %v1911
      %1928 = vst.msk [vmem:[%s248 + $0x50] sm:$0xff] %vm288, %v1912
      %1929 = vst.msk [vmem:[%s248 + $0x58] sm:$0xff] %vm288, %v1913
      %1930 = vst.msk [vmem:[%s248 + $0x60] sm:$0xff] %vm288, %v1914
      %1931 = vst.msk [vmem:[%s248 + $0x68] sm:$0xff] %vm288, %v1915
      %1932 = vst.msk [vmem:[%s248 + $0x70] sm:$0xff] %vm288, %v1916
      %1933 = vst.msk [vmem:[%s248 + $0x78] sm:$0xff] %vm288, %v1917
      %s1934 = smul.u32 8, %s21
      %p1935 = scmp.lt.s32.totalorder %s20, 1
      %s1936 = scalar_select %p1935, %s20, 1
      %p1937 = scmp.lt.s32.totalorder %s1934, 15
      %s1938 = scalar_select %p1937, %s1934, 15
      %s1939 = smul.addr %s1938, 2
      %s1940 = smul.addr %s1936, 32
      %s1941 = sadd.s32 %s1939, %s1940
      %s1942 = smul.addr %s1941, 8
      %s1943 = scalar_lea.vmem %s5, %s1942
      // Predicated region
      $region41: #{tpu_custom_call.1} parent=39 // pred_check
        %p1944 = pneg %p158
      $region42: #{tpu_custom_call.1} parent=39 // pred_check_branch
        %1946 = sbr.rel (%p1944) target = $region44
      $region43: #{tpu_custom_call.1} parent=39 // pred_region
        %s1947 = smul.u32 8, %s21
      $region44: #{tpu_custom_call.1} parent=39 // pred_fallthru
        _
    $region40: #{tpu_custom_call.1} parent=5 // pred_fallthru
      _
    %p1948 = scmp.le.s32.totalorder 2, %s11
    // Predicated region
    $region45: #{tpu_custom_call.1} parent=5 // pred_check
      %p1949 = pneg %p1948
    $region46: #{tpu_custom_call.1} parent=5 // pred_check_branch
      %1951 = sbr.rel (%p1949) target = $region48
    $region47: #{tpu_custom_call.1} parent=5 // pred_region
      %s1952 = ssub.s32 %s11, 2
      // Predicated region
      $region49: #{tpu_custom_call.1} parent=47 // pred_check
        %p1953 = pneg %p164
      $region50: #{tpu_custom_call.1} parent=47 // pred_check_branch
        %1955 = sbr.rel (%p1953) target = $region52
      $region51: #{tpu_custom_call.1} parent=47 // pred_region
        %s1956 = smul.u32 8, %s23
        %p1957 = scmp.lt.s32.totalorder %s22, 1
        %s1958 = scalar_select %p1957, %s22, 1
        %p1959 = scmp.lt.s32.totalorder %s1956, 15
        %s1960 = scalar_select %p1959, %s1956, 15
        %s1961 = smul.addr %s1960, 2
        %s1962 = smul.addr %s1958, 32
        %s1963 = sadd.s32 %s1961, %s1962
        %s1964 = smul.addr %s1963, 8
        %s1965 = scalar_lea.vmem %s5, %s1964
      $region52: #{tpu_custom_call.1} parent=47 // pred_fallthru
        _
    $region48: #{tpu_custom_call.1} parent=5 // pred_fallthru
      _
  $region6: #{tpu_custom_call.1} parent=0 // loop_footer
    %s15 = sadd.s32 1, %s11
  $region7: #{tpu_custom_call.1} parent=0 // loop_footer_branch
    %10 = sbr.rel target = $region3
  $region8: #{tpu_custom_call.1} parent=0 // loop_exit
    _

</llo_original>
